<compile_context>
chip_gen: v7x
topology: tpu7x:2x2x1
jax: 0.10.0
libtpu: 0.0.40
codegen_flags: <defaults>
</compile_context>

<pallas_src>
from functools import partial

import jax
import jax.numpy as jnp
from jax.experimental import pallas as pl
from jax.experimental.pallas import tpu as pltpu


def _pfn_kernel(x_ref, w_ref, shift_ref, o_ref, *, approx_recip, gate_dtype):
    TP, N, Cin = x_ref.shape
    Cout = o_ref.shape[-1]

    x = x_ref[...].reshape(TP * N, Cin)

    # Single fused MXU pass, 4*Cout (=128 for Cout=32) output lanes:
    #   cols [0:C)    avg-gate pre-activation
    #   cols [C:2C)   sum-gate pre-activation
    #   cols [2C:3C)  BN-scaled linear (avg branch + max branch)
    #   cols [3C:4C)  BN-scaled linear (sum branch; duplicated by the MXU)
    y = jnp.dot(x, w_ref[...], preferred_element_type=jnp.float32)

    shift2 = shift_ref[...]                                  # (1, 2*Cout) f32

    gates_pre = y[:, 0:2 * Cout].astype(gate_dtype)          # lane offset 0
    lin2_f32 = y[:, 2 * Cout:4 * Cout]                       # (., 2*Cout) f32

    # sigmoid(relu(z)) computed once on the 2*Cout-wide slab; the reciprocal
    # rides the EUP slot when approx_recip=True.
    e = jnp.exp(-jnp.maximum(gates_pre, 0))
    gates = pl.reciprocal(1 + e, approx=approx_recip)

    # Both gated branches: scale, shift, ReLU — all 2*Cout wide.
    b = jnp.maximum(lin2_f32.astype(gate_dtype) * gates
                    + shift2.astype(gate_dtype), 0)
    # Reduce over points; accumulate in f32 regardless of gate dtype.
    r = jnp.sum(b.astype(jnp.float32).reshape(TP, N, 2 * Cout), axis=1)
    r_avg = r[:, 0:Cout]
    r_sum = r[:, Cout:2 * Cout]

    # Plain (max) branch stays in f32 and reuses the already-sliced lin slab.
    bmax = jnp.maximum(lin2_f32[:, 0:Cout] + shift2[:, 0:Cout], 0.0)
    r_max = jnp.max(bmax.reshape(TP, N, Cout), axis=1)

    out = r_avg * (1.0 / N) + 0.5 * (r_max + r_sum)          # (TP, Cout)
    o_ref[...] = out.astype(o_ref.dtype)


def _device_kind():
    try:
        return jax.devices()[0].device_kind.lower()
    except Exception:
        return ""


def _pick_tile_p(P, cap, min_steps):
    """Pillar-axis tile: as large as possible (<= cap) while leaving >=
    min_steps grid steps so the input DMA pipelines (and both v7x TCs get
    work).  Prefers a multiple-of-8 divisor of P near the ideal size; if none
    exists the caller pads P up to a multiple of the returned tile."""
    ideal = min(cap, max(8, (P // min_steps) // 8 * 8))
    t = ideal
    while t >= max(8, ideal // 2):
        if P % t == 0:
            return t, P            # exact divisor: no padding needed
        t -= 8
    p_pad = ((P + ideal - 1) // ideal) * ideal
    return ideal, p_pad


def pfn_layer1(inputs, w_lin, w_avg, w_sum, gamma, beta, run_mean, run_var,
               *, eps=1e-3, tile_p=None, mxu_dtype=None, gate_dtype=None,
               approx_sigmoid=True, vmem_limit_bytes=None):
    """inputs: (P, N, Cin); w_*: torch-style (Cout, Cin); returns (P, 1, Cout).

    approx_sigmoid=True uses the EUP approx reciprocal (default; ~1e-3 rel err).
    gate_dtype=None auto-selects bf16 elementwise gating on v6e/v7x, f32 else.
    """
    P, N, Cin = inputs.shape
    Cout = w_lin.shape[0]

    kind = _device_kind()
    is_v7 = ("v7" in kind) or ("7x" in kind)
    is_v6 = "v6" in kind

    if gate_dtype is None:
        # bf16 VPU/EUP only exists on v6e/v7x; older chips keep f32 elementwise.
        gate_dtype = jnp.bfloat16 if (is_v6 or is_v7) else jnp.float32
    if mxu_dtype is None:
        # Never pay a separate wrapper-side HBM pass just to downcast inputs.
        mxu_dtype = jnp.bfloat16 if inputs.dtype == jnp.bfloat16 else jnp.float32
    if vmem_limit_bytes is None:
        # v7x has only 64 MiB VMEM/TC -> leave headroom.
        vmem_limit_bytes = (40 if is_v7 else 48) * 1024 * 1024

    cap = 256 if is_v7 else 512
    min_steps = 8 if is_v7 else 4
    if tile_p is None:
        tile_p, P_pad = _pick_tile_p(P, cap, min_steps)
    else:
        assert tile_p % 8 == 0, "tile_p must be a multiple of 8"
        P_pad = ((P + tile_p - 1) // tile_p) * tile_p

    # Fold eval-mode BatchNorm into a per-channel scale/shift; fold the scale
    # into the linear weight columns so the kernel applies only `lin*gate+shift`.
    inv_std = 1.0 / jnp.sqrt(run_var.astype(jnp.float32) + eps)
    scale = gamma.astype(jnp.float32) * inv_std                       # (Cout,)
    shift = (beta.astype(jnp.float32)
             - run_mean.astype(jnp.float32) * scale).reshape(1, Cout)
    shift2 = jnp.concatenate([shift, shift], axis=1)                  # (1, 2*Cout)

    wl_scaled = (w_lin.astype(jnp.float32) * scale[:, None]).T        # (Cin, Cout)
    # Fused weight: [avg-gate | sum-gate | lin | lin]  ->  (Cin, 4*Cout).
    # Gate slab at lane offset 0; lin duplicated by the (idle) MXU so the
    # kernel needs no lane concat and y is a clean 128-lane tile.
    w_fused = jnp.concatenate(
        [w_avg.astype(jnp.float32).T, w_sum.astype(jnp.float32).T,
         wl_scaled, wl_scaled], axis=1).astype(mxu_dtype)             # (Cin, 4*Cout)

    x = inputs if inputs.dtype == mxu_dtype else inputs.astype(mxu_dtype)
    if P_pad != P:
        x = jnp.pad(x, ((0, P_pad - P), (0, 0), (0, 0)))

    grid = (P_pad // tile_p,)
    out2d = pl.pallas_call(
        partial(_pfn_kernel, approx_recip=approx_sigmoid, gate_dtype=gate_dtype),
        out_shape=jax.ShapeDtypeStruct((P_pad, Cout), jnp.float32),
        grid_spec=pltpu.PrefetchScalarGridSpec(
            num_scalar_prefetch=0,
            grid=grid,
            in_specs=[
                pl.BlockSpec((tile_p, N, Cin), lambda i: (i, 0, 0)),
                pl.BlockSpec((Cin, 4 * Cout), lambda i: (0, 0)),
                pl.BlockSpec((1, 2 * Cout), lambda i: (0, 0)),
            ],
            # Lane/sublane-dense 2D output block (no size-1 middle dim).
            out_specs=pl.BlockSpec((tile_p, Cout), lambda i: (i, 0)),
        ),
        compiler_params=pltpu.CompilerParams(
            dimension_semantics=("parallel",),
            vmem_limit_bytes=vmem_limit_bytes),
    )(x, w_fused, shift2)

    # Drop padded pillars; callers expect the PyTorch (P, 1, Cout) shape.
    return out2d[:P].reshape(P, 1, Cout)


def _reference(inputs, w_lin, w_avg, w_sum, gamma, beta, run_mean, run_var,
               eps=1e-3):
    lin = inputs @ w_lin.T
    g_avg = jax.nn.sigmoid(jnp.maximum(inputs @ w_avg.T, 0.0))
    g_sum = jax.nn.sigmoid(jnp.maximum(inputs @ w_sum.T, 0.0))
    inv_std = 1.0 / jnp.sqrt(run_var + eps)
    bn = lambda v: (v - run_mean) * inv_std * gamma + beta
    xa = jnp.maximum(bn(lin * g_avg), 0.0)
    xs = jnp.maximum(bn(lin * g_sum), 0.0)
    xl = jnp.maximum(bn(lin), 0.0)
    x_avg = jnp.mean(xa, axis=1, keepdims=True)
    x_sum = jnp.sum(xs, axis=1, keepdims=True)
    x_max = jnp.max(xl, axis=1, keepdims=True)
    return x_avg + (x_max + x_sum) / 2.0


if __name__ == "__main__":
    key = jax.random.PRNGKey(0)
    k_in, k_wl, k_wa, k_ws, k_g, k_b, k_m, k_v = jax.random.split(key, 8)

    P, N, Cin, Cout = 64, 32, 16, 32   # pillars, points/pillar, in_ch, out_ch

    inputs = jax.random.normal(k_in, (P, N, Cin), dtype=jnp.float32)
    w_lin = jax.random.normal(k_wl, (Cout, Cin), dtype=jnp.float32) * 0.1
    w_avg = jax.random.normal(k_wa, (Cout, Cin), dtype=jnp.float32) * 0.1
    w_sum = jax.random.normal(k_ws, (Cout, Cin), dtype=jnp.float32) * 0.1
    gamma = 1.0 + 0.1 * jax.random.normal(k_g, (Cout,), dtype=jnp.float32)
    beta = 0.1 * jax.random.normal(k_b, (Cout,), dtype=jnp.float32)
    run_mean = 0.1 * jax.random.normal(k_m, (Cout,), dtype=jnp.float32)
    run_var = jnp.abs(1.0 + 0.1 * jax.random.normal(k_v, (Cout,), dtype=jnp.float32))

    ref = _reference(inputs, w_lin, w_avg, w_sum, gamma, beta, run_mean, run_var)

    # 1) Exact path (f32 gating, exact reciprocal): tight tolerance.
    out = pfn_layer1(inputs, w_lin, w_avg, w_sum, gamma, beta, run_mean, run_var,
                     gate_dtype=jnp.float32, approx_sigmoid=False)
    out = jax.block_until_ready(out)
    assert out.shape == (P, 1, Cout)
    assert jnp.allclose(out, ref, atol=1e-4, rtol=1e-4)

    # 2) Default fast path (EUP approx sigmoid; bf16 gating on v6e/v7x):
    #    looser tolerance reflects approx reciprocal / bf16 rounding only.
    out_fast = pfn_layer1(inputs, w_lin, w_avg, w_sum, gamma, beta,
                          run_mean, run_var)
    out_fast = jax.block_until_ready(out_fast)
    assert out_fast.shape == (P, 1, Cout)
    assert bool(jnp.all(jnp.isfinite(out_fast)))
    assert jnp.allclose(out_fast, ref, atol=1.5e-1, rtol=5e-2)

    # 3) Pillar count not divisible by the tile exercises the padding path.
    P_odd = 50
    inputs_odd = inputs[:P_odd]
    ref_odd = _reference(inputs_odd, w_lin, w_avg, w_sum, gamma, beta,
                         run_mean, run_var)
    out_odd = pfn_layer1(inputs_odd, w_lin, w_avg, w_sum, gamma, beta,
                         run_mean, run_var,
                         gate_dtype=jnp.float32, approx_sigmoid=False)
    out_odd = jax.block_until_ready(out_odd)
    assert out_odd.shape == (P_odd, 1, Cout)
    assert jnp.allclose(out_odd, ref_odd, atol=1e-4, rtol=1e-4)

    print("KERNEL_OK")
</pallas_src>

<mosaic_0001>
module attributes {stable_mosaic.version = 11 : i64} {
  func.func @_pfn_kernel(%arg0: i32, %arg1: memref<16x32x16xf32, #tpu.memory_space<vmem>>, %arg2: memref<16x128xf32, #tpu.memory_space<vmem>>, %arg3: memref<1x64xf32, #tpu.memory_space<vmem>>, %arg4: memref<16x32xf32, #tpu.memory_space<vmem>>) attributes {dimension_semantics = [#tpu.dimension_semantics<parallel>], iteration_bounds = array<i64: 4>, scalar_prefetch = 0 : i64, scratch_operands = 0 : i64, tpu.core_type = #tpu.core_type<tc>, window_params = [{transform_indices = @transform_0, window_bounds = array<i64: 16, 32, 16>}, {pipeline_mode = #tpu.pipeline_mode<synchronous>, transform_indices = @transform_1, window_bounds = array<i64: 16, 128>}, {pipeline_mode = #tpu.pipeline_mode<synchronous>, transform_indices = @transform_2, window_bounds = array<i64: 1, 64>}, {transform_indices = @transform_3, window_bounds = array<i64: 16, 32>}]} {
    %c0 = arith.constant 0 : index
    %c0_0 = arith.constant 0 : index
    %c0_1 = arith.constant 0 : index
    %0 = vector.load %arg1[%c0, %c0_0, %c0_1] : memref<16x32x16xf32, #tpu.memory_space<vmem>>, vector<16x32x16xf32>
    %1 = vector.shape_cast %0 : vector<16x32x16xf32> to vector<512x16xf32>
    %c0_2 = arith.constant 0 : index
    %c0_3 = arith.constant 0 : index
    %2 = vector.load %arg2[%c0_2, %c0_3] : memref<16x128xf32, #tpu.memory_space<vmem>>, vector<16x128xf32>
    %cst = arith.constant dense<0.000000e+00> : vector<512x128xf32>
    %3 = tpu.matmul %1, %2, %cst {dimension_numbers = #tpu.dot_dimension_numbers<[1], [0], [0], [1], [0, 0, 1, 1], [], []>} : vector<512x16xf32>, vector<16x128xf32>, vector<512x128xf32> -> vector<512x128xf32>
    %c0_4 = arith.constant 0 : index
    %c0_5 = arith.constant 0 : index
    %4 = vector.load %arg3[%c0_4, %c0_5] : memref<1x64xf32, #tpu.memory_space<vmem>>, vector<1x64xf32>
    %5 = vector.extract_strided_slice %3 {offsets = [0, 0], sizes = [512, 64], strides = [1, 1]} : vector<512x128xf32> to vector<512x64xf32>
    %6 = vector.extract_strided_slice %3 {offsets = [0, 64], sizes = [512, 64], strides = [1, 1]} : vector<512x128xf32> to vector<512x64xf32>
    %cst_6 = arith.constant 0.000000e+00 : f32
    %7 = vector.broadcast %cst_6 : f32 to vector<512x64xf32>
    %8 = arith.maximumf %5, %7 : vector<512x64xf32>
    %cst_7 = arith.constant 0.000000e+00 : f32
    %9 = vector.broadcast %cst_7 : f32 to vector<512x64xf32>
    %10 = arith.subf %9, %8 : vector<512x64xf32>
    %11 = math.exp %10 : vector<512x64xf32>
    %cst_8 = arith.constant 1.000000e+00 : f32
    %12 = vector.broadcast %cst_8 : f32 to vector<512x64xf32>
    %13 = arith.addf %12, %11 : vector<512x64xf32>
    %14 = tpu.reciprocal %13 : vector<512x64xf32> -> vector<512x64xf32>
    %15 = arith.mulf %6, %14 : vector<512x64xf32>
    %16 = vector.broadcast %4 : vector<1x64xf32> to vector<512x64xf32>
    %17 = arith.addf %15, %16 : vector<512x64xf32>
    %cst_9 = arith.constant 0.000000e+00 : f32
    %18 = vector.broadcast %cst_9 : f32 to vector<512x64xf32>
    %19 = arith.maximumf %17, %18 : vector<512x64xf32>
    %20 = vector.shape_cast %19 : vector<512x64xf32> to vector<16x32x64xf32>
    %cst_10 = arith.constant dense<0.000000e+00> : vector<16x64xf32>
    %21 = vector.multi_reduction <add>, %20, %cst_10 [1] : vector<16x32x64xf32> to vector<16x64xf32>
    %22 = vector.extract_strided_slice %21 {offsets = [0, 0], sizes = [16, 32], strides = [1, 1]} : vector<16x64xf32> to vector<16x32xf32>
    %23 = vector.extract_strided_slice %21 {offsets = [0, 32], sizes = [16, 32], strides = [1, 1]} : vector<16x64xf32> to vector<16x32xf32>
    %24 = vector.extract_strided_slice %6 {offsets = [0, 0], sizes = [512, 32], strides = [1, 1]} : vector<512x64xf32> to vector<512x32xf32>
    %25 = vector.extract_strided_slice %4 {offsets = [0, 0], sizes = [1, 32], strides = [1, 1]} : vector<1x64xf32> to vector<1x32xf32>
    %26 = vector.broadcast %25 : vector<1x32xf32> to vector<512x32xf32>
    %27 = arith.addf %24, %26 : vector<512x32xf32>
    %cst_11 = arith.constant 0.000000e+00 : f32
    %28 = vector.broadcast %cst_11 : f32 to vector<512x32xf32>
    %29 = arith.maximumf %27, %28 : vector<512x32xf32>
    %30 = vector.shape_cast %29 : vector<512x32xf32> to vector<16x32x32xf32>
    %cst_12 = arith.constant dense<0xFF800000> : vector<16x32xf32>
    %31 = vector.multi_reduction <maximumf>, %30, %cst_12 [1] : vector<16x32x32xf32> to vector<16x32xf32>
    %cst_13 = arith.constant 3.125000e-02 : f32
    %32 = vector.broadcast %cst_13 : f32 to vector<16x32xf32>
    %33 = arith.mulf %22, %32 : vector<16x32xf32>
    %34 = arith.addf %31, %23 : vector<16x32xf32>
    %cst_14 = arith.constant 5.000000e-01 : f32
    %35 = vector.broadcast %cst_14 : f32 to vector<16x32xf32>
    %36 = arith.mulf %35, %34 : vector<16x32xf32>
    %37 = arith.addf %33, %36 : vector<16x32xf32>
    %c0_15 = arith.constant 0 : index
    %c0_16 = arith.constant 0 : index
    %38 = vector.load %arg4[%c0_15, %c0_16] : memref<16x32xf32, #tpu.memory_space<vmem>>, vector<16x32xf32>
    tpu.vector_store %arg4[%c0_15, %c0_16], %37 {strides = array<i32>} : memref<16x32xf32, #tpu.memory_space<vmem>>, vector<16x32xf32>,
    return
  }
  func.func @transform_0(%arg0: i32) -> (i32, i32, i32) {
    %c0_i32 = arith.constant 0 : i32
    %c0_i32_0 = arith.constant 0 : i32
    %c0_i32_1 = arith.constant 0 : i32
    return %arg0, %c0_i32, %c0_i32_0 : i32, i32, i32
  }
  func.func @transform_1(%arg0: i32) -> (i32, i32) {
    %c0_i32 = arith.constant 0 : i32
    %c0_i32_0 = arith.constant 0 : i32
    %c0_i32_1 = arith.constant 0 : i32
    return %c0_i32, %c0_i32_0 : i32, i32
  }
  func.func @transform_2(%arg0: i32) -> (i32, i32) {
    %c0_i32 = arith.constant 0 : i32
    %c0_i32_0 = arith.constant 0 : i32
    %c0_i32_1 = arith.constant 0 : i32
    return %c0_i32, %c0_i32_0 : i32, i32
  }
  func.func @transform_3(%arg0: i32) -> (i32, i32) {
    %c0_i32 = arith.constant 0 : i32
    %c0_i32_0 = arith.constant 0 : i32
    return %arg0, %c0_i32 : i32, i32
  }
}

</mosaic_0001>

<llo_original>
// kernel: tpu_custom_call.1
$region0: #{tpu_custom_call.1}
  #allocation0 [shape = 'u32[]', space=smem, size = 0x4, offset = 0x4, fixed_abs, tag = 'smem constant byte address 0x4 - core index']
  #allocation1 [shape = 'u32[144,128]{1,0:T(1,128)}', space=vmem, size = 0x12000, scoped, tag = 'internal scratch']
  %s0 = inlined_call_operand.vmem [shape: f32[64,32,16], index: 0, kind: input, shape index: {}]
  %s1 = inlined_call_operand.vmem [shape: f32[16,128], index: 1, kind: input, shape index: {}]
  %s2 = inlined_call_operand.vmem [shape: f32[1,64], index: 2, kind: input, shape index: {}]
  %s3 = inlined_call_operand.vmem [shape: f32[64,32], index: 3, kind: output, shape index: {}]
  %s4 = sld [smem:[#allocation0]]
  $region45: #{tpu_custom_call.1} parent=0
    _
  %s6 = ssub.s32 1, %s4
  %s7 = scalar_select 0, %s6, %s4
  loop: start=0, step=1, limit=6
  $region2: #{tpu_custom_call.1} parent=0 // loop_pre_header
    _
  $region3: #{tpu_custom_call.1} parent=0 // loop_header
    %s9 = sphi 0, %s13
    %p10 = scmp.ge.s32.totalorder %s9, 6
    %s19 = sphi 0, %s21
    %s22 = sphi 0, %s19
    %s23 = sphi 0, %s22
    %s39 = sphi 0, %s23
    %s43 = sphi 0, %s43
    %s45 = sphi 0, %s43
    %s46 = sphi 0, %s45
    %s60 = sphi 0, %s46
    %s64 = sphi 0, %s64
    %s66 = sphi 0, %s64
    %s67 = sphi 0, %s66
    %s81 = sphi 0, %s67
    %s87 = sphi 0, %s89
    %s90 = sphi 0, %s87
    %s91 = sphi 0, %s90
    %s107 = sphi 0, %s91
  $region4: #{tpu_custom_call.1} parent=0 // loop_header_branch
    %12 = sbr.rel (%p10) target = $region8
  $region5: #{tpu_custom_call.1} parent=0 // loop_body
    %s14 = ssub.s32 %s9, 1
    %s15 = ssub.s32 %s9, 2
    %s16 = sadd.s32 %s9, 1
    %s17 = ssub.s32 %s9, %s16
    %p18 = scmp.eq.s32.totalorder %s17, 0
    %s20 = sadd.s32 %s19, 1
    %s21 = scalar_select %p18, %s19, %s20
    %p24 = pneg %p18
    %p25 = scmp.eq.s32.totalorder %s9, 3
    %p26 = por %p24, %p25
    %p27 = scmp.ne.s32.totalorder %s19, %s22
    %p28 = scmp.eq.s32.totalorder %s9, 0
    %p29 = por %p27, %p28
    %p30 = scmp.ne.s32.totalorder %s19, %s22
    %p31 = scmp.eq.s32.totalorder %s14, 3
    %p32 = por %p30, %p31
    %p33 = scmp.ne.s32.totalorder %s22, %s23
    %p34 = scmp.eq.s32.totalorder %s14, 0
    %p35 = por %p33, %p34
    %p36 = scmp.ne.s32.totalorder %s22, %s23
    %p37 = scmp.eq.s32.totalorder %s15, 3
    %p38 = por %p36, %p37
    %p40 = scmp.ne.s32.totalorder %s23, %s39
    %p41 = scmp.eq.s32.totalorder %s15, 0
    %p42 = por %p40, %p41
    %s44 = sadd.s32 %s43, 1
    %p47 = scmp.eq.s32.totalorder %s9, 3
    %p48 = scmp.ne.s32.totalorder %s43, %s45
    %p49 = scmp.eq.s32.totalorder %s9, 0
    %p50 = por %p48, %p49
    %p51 = scmp.ne.s32.totalorder %s43, %s45
    %p52 = scmp.eq.s32.totalorder %s14, 3
    %p53 = por %p51, %p52
    %p54 = scmp.ne.s32.totalorder %s45, %s46
    %p55 = scmp.eq.s32.totalorder %s14, 0
    %p56 = por %p54, %p55
    %p57 = scmp.ne.s32.totalorder %s45, %s46
    %p58 = scmp.eq.s32.totalorder %s15, 3
    %p59 = por %p57, %p58
    %p61 = scmp.ne.s32.totalorder %s46, %s60
    %p62 = scmp.eq.s32.totalorder %s15, 0
    %p63 = por %p61, %p62
    %s65 = sadd.s32 %s64, 1
    %p68 = scmp.eq.s32.totalorder %s9, 3
    %p69 = scmp.ne.s32.totalorder %s64, %s66
    %p70 = scmp.eq.s32.totalorder %s9, 0
    %p71 = por %p69, %p70
    %p72 = scmp.ne.s32.totalorder %s64, %s66
    %p73 = scmp.eq.s32.totalorder %s14, 3
    %p74 = por %p72, %p73
    %p75 = scmp.ne.s32.totalorder %s66, %s67
    %p76 = scmp.eq.s32.totalorder %s14, 0
    %p77 = por %p75, %p76
    %p78 = scmp.ne.s32.totalorder %s66, %s67
    %p79 = scmp.eq.s32.totalorder %s15, 3
    %p80 = por %p78, %p79
    %p82 = scmp.ne.s32.totalorder %s67, %s81
    %p83 = scmp.eq.s32.totalorder %s15, 0
    %p84 = por %p82, %p83
    %s85 = ssub.s32 %s9, %s16
    %p86 = scmp.eq.s32.totalorder %s85, 0
    %s88 = sadd.s32 %s87, 1
    %s89 = scalar_select %p86, %s87, %s88
    %p92 = pneg %p86
    %p93 = scmp.eq.s32.totalorder %s9, 3
    %p94 = por %p92, %p93
    %p95 = scmp.ne.s32.totalorder %s87, %s90
    %p96 = scmp.eq.s32.totalorder %s9, 0
    %p97 = por %p95, %p96
    %p98 = scmp.ne.s32.totalorder %s87, %s90
    %p99 = scmp.eq.s32.totalorder %s14, 3
    %p100 = por %p98, %p99
    %p101 = scmp.ne.s32.totalorder %s90, %s91
    %p102 = scmp.eq.s32.totalorder %s14, 0
    %p103 = por %p101, %p102
    %p104 = scmp.ne.s32.totalorder %s90, %s91
    %p105 = scmp.eq.s32.totalorder %s15, 3
    %p106 = por %p104, %p105
    %p108 = scmp.ne.s32.totalorder %s91, %s107
    %p109 = scmp.eq.s32.totalorder %s15, 0
    %p110 = por %p108, %p109
    %p111 = scmp.le.s32.totalorder 1, %s9
    %p112 = scmp.lt.s32.totalorder %s9, 5
    %p113 = pnand %p111, %p112
    %p114 = pneg %p113
    // Predicated region
    $region9: #{tpu_custom_call.1} parent=5 // pred_check
      _
    $region10: #{tpu_custom_call.1} parent=5 // pred_check_branch
      %116 = sbr.rel (%p113) target = $region12
    $region11: #{tpu_custom_call.1} parent=5 // pred_region
      %s117 = ssub.s32 %s9, 1
      // Predicated region
      $region13: #{tpu_custom_call.1} parent=11 // pred_check
        %p118 = pneg %p56
      $region14: #{tpu_custom_call.1} parent=11 // pred_check_branch
        %120 = sbr.rel (%p118) target = $region16
      $region15: #{tpu_custom_call.1} parent=11 // pred_region
        _
      $region16: #{tpu_custom_call.1} parent=11 // pred_fallthru
        _
      // Predicated region
      $region17: #{tpu_custom_call.1} parent=11 // pred_check
        %p121 = pneg %p77
      $region18: #{tpu_custom_call.1} parent=11 // pred_check_branch
        %123 = sbr.rel (%p121) target = $region20
      $region19: #{tpu_custom_call.1} parent=11 // pred_region
        _
      $region20: #{tpu_custom_call.1} parent=11 // pred_fallthru
        _
    $region12: #{tpu_custom_call.1} parent=5 // pred_fallthru
      _
    %p124 = scmp.lt.s32.totalorder %s9, 4
    // Predicated region
    $region21: #{tpu_custom_call.1} parent=5 // pred_check
      %p125 = pneg %p124
    $region22: #{tpu_custom_call.1} parent=5 // pred_check_branch
      %127 = sbr.rel (%p125) target = $region24
    $region23: #{tpu_custom_call.1} parent=5 // pred_region
      // Predicated region
      $region25: #{tpu_custom_call.1} parent=23 // pred_check
        %p128 = pneg %p29
      $region26: #{tpu_custom_call.1} parent=23 // pred_check_branch
        %130 = sbr.rel (%p128) target = $region28
      $region27: #{tpu_custom_call.1} parent=23 // pred_region
        %s131 = smul.u32 16, %s9
        %p132 = scmp.lt.s32.totalorder %s131, 63
        %s133 = scalar_select %p132, %s131, 63
        %s134 = smul.addr %s133, 4
        %s135 = smul.addr %s134, 8
        %s136 = scalar_lea.vmem %s0, %s135
        %s137 = smul.u32 16, %s9
      $region28: #{tpu_custom_call.1} parent=23 // pred_fallthru
        _
    $region24: #{tpu_custom_call.1} parent=5 // pred_fallthru
      _
    %p138 = scmp.le.s32.totalorder 1, %s9
    %p139 = scmp.lt.s32.totalorder %s9, 5
    %p140 = pnand %p138, %p139
    %p141 = pneg %p140
    // Predicated region
    $region29: #{tpu_custom_call.1} parent=5 // pred_check
      _
    $region30: #{tpu_custom_call.1} parent=5 // pred_check_branch
      %143 = sbr.rel (%p140) target = $region32
    $region31: #{tpu_custom_call.1} parent=5 // pred_region
      %s144 = ssub.s32 %s9, 1
      %s145 = smul.u32 16, %s14
      %p146 = scmp.lt.s32.totalorder %s145, 63
      %s147 = scalar_select %p146, %s145, 63
      %s148 = smul.addr %s147, 4
      %s149 = smul.addr %s148, 8
      %s150 = scalar_lea.vmem %s0, %s149
      %p151 = pneg %p35
      %p152 = pneg %p32
      %p153 = pneg %p56
      %p154 = pneg %p53
      %p155 = pneg %p77
      %p156 = pneg %p74
      %p157 = pneg %p103
      %p158 = pneg %p100
      %s159 = smul.u32 2, %s14
      %p160 = scmp.lt.s32.totalorder %s159, 7
      %s161 = scalar_select %p160, %s159, 7
      %s162 = smul.addr %s161, 8
      %s163 = scalar_lea.vmem %s3, %s162
      %s164 = smul.u32 16, %s14
      %p165 = scmp.lt.s32.totalorder %s164, 63
      %s166 = scalar_select %p165, %s164, 63
      %s167 = smul.addr %s166, 4
      %s168 = smul.addr %s167, 8
      %s169 = scalar_lea.vmem %s0, %s168
      %s170 = smul.u32 16, %s14
      %s171 = smul.u32 2, %s14
      %p172 = scmp.lt.s32.totalorder %s171, 7
      %s173 = scalar_select %p172, %s171, 7
      %s174 = smul.addr %s173, 8
      %s175 = scalar_lea.vmem %s3, %s174
      %s176 = smul.u32 2, %s14
      %v177 = vld [vmem:[%s169] sm:$0xff]
      %v178 = vld [vmem:[%s169 + $0x8] sm:$0xff]
      %v179 = vld [vmem:[%s169 + $0x10] sm:$0xff]
      %v180 = vld [vmem:[%s169 + $0x18] sm:$0xff]
      %v181 = vld [vmem:[%s169 + $0x20] sm:$0xff]
      %v182 = vld [vmem:[%s169 + $0x28] sm:$0xff]
      %v183 = vld [vmem:[%s169 + $0x30] sm:$0xff]
      %v184 = vld [vmem:[%s169 + $0x38] sm:$0xff]
      %v185 = vld [vmem:[%s169 + $0x40] sm:$0xff]
      %v186 = vld [vmem:[%s169 + $0x48] sm:$0xff]
      %v187 = vld [vmem:[%s169 + $0x50] sm:$0xff]
      %v188 = vld [vmem:[%s169 + $0x58] sm:$0xff]
      %v189 = vld [vmem:[%s169 + $0x60] sm:$0xff]
      %v190 = vld [vmem:[%s169 + $0x68] sm:$0xff]
      %v191 = vld [vmem:[%s169 + $0x70] sm:$0xff]
      %v192 = vld [vmem:[%s169 + $0x78] sm:$0xff]
      %v193 = vld [vmem:[%s169 + $0x80] sm:$0xff]
      %v194 = vld [vmem:[%s169 + $0x88] sm:$0xff]
      %v195 = vld [vmem:[%s169 + $0x90] sm:$0xff]
      %v196 = vld [vmem:[%s169 + $0x98] sm:$0xff]
      %v197 = vld [vmem:[%s169 + $0xa0] sm:$0xff]
      %v198 = vld [vmem:[%s169 + $0xa8] sm:$0xff]
      %v199 = vld [vmem:[%s169 + $0xb0] sm:$0xff]
      %v200 = vld [vmem:[%s169 + $0xb8] sm:$0xff]
      %v201 = vld [vmem:[%s169 + $0xc0] sm:$0xff]
      %v202 = vld [vmem:[%s169 + $0xc8] sm:$0xff]
      %v203 = vld [vmem:[%s169 + $0xd0] sm:$0xff]
      %v204 = vld [vmem:[%s169 + $0xd8] sm:$0xff]
      %v205 = vld [vmem:[%s169 + $0xe0] sm:$0xff]
      %v206 = vld [vmem:[%s169 + $0xe8] sm:$0xff]
      %v207 = vld [vmem:[%s169 + $0xf0] sm:$0xff]
      %v208 = vld [vmem:[%s169 + $0xf8] sm:$0xff]
      %v209 = vld [vmem:[%s169 + $0x100] sm:$0xff]
      %v210 = vld [vmem:[%s169 + $0x108] sm:$0xff]
      %v211 = vld [vmem:[%s169 + $0x110] sm:$0xff]
      %v212 = vld [vmem:[%s169 + $0x118] sm:$0xff]
      %v213 = vld [vmem:[%s169 + $0x120] sm:$0xff]
      %v214 = vld [vmem:[%s169 + $0x128] sm:$0xff]
      %v215 = vld [vmem:[%s169 + $0x130] sm:$0xff]
      %v216 = vld [vmem:[%s169 + $0x138] sm:$0xff]
      %v217 = vld [vmem:[%s169 + $0x140] sm:$0xff]
      %v218 = vld [vmem:[%s169 + $0x148] sm:$0xff]
      %v219 = vld [vmem:[%s169 + $0x150] sm:$0xff]
      %v220 = vld [vmem:[%s169 + $0x158] sm:$0xff]
      %v221 = vld [vmem:[%s169 + $0x160] sm:$0xff]
      %v222 = vld [vmem:[%s169 + $0x168] sm:$0xff]
      %v223 = vld [vmem:[%s169 + $0x170] sm:$0xff]
      %v224 = vld [vmem:[%s169 + $0x178] sm:$0xff]
      %v225 = vld [vmem:[%s169 + $0x180] sm:$0xff]
      %v226 = vld [vmem:[%s169 + $0x188] sm:$0xff]
      %v227 = vld [vmem:[%s169 + $0x190] sm:$0xff]
      %v228 = vld [vmem:[%s169 + $0x198] sm:$0xff]
      %v229 = vld [vmem:[%s169 + $0x1a0] sm:$0xff]
      %v230 = vld [vmem:[%s169 + $0x1a8] sm:$0xff]
      %v231 = vld [vmem:[%s169 + $0x1b0] sm:$0xff]
      %v232 = vld [vmem:[%s169 + $0x1b8] sm:$0xff]
      %v233 = vld [vmem:[%s169 + $0x1c0] sm:$0xff]
      %v234 = vld [vmem:[%s169 + $0x1c8] sm:$0xff]
      %v235 = vld [vmem:[%s169 + $0x1d0] sm:$0xff]
      %v236 = vld [vmem:[%s169 + $0x1d8] sm:$0xff]
      %v237 = vld [vmem:[%s169 + $0x1e0] sm:$0xff]
      %v238 = vld [vmem:[%s169 + $0x1e8] sm:$0xff]
      %v239 = vld [vmem:[%s169 + $0x1f0] sm:$0xff]
      %v240 = vld [vmem:[%s169 + $0x1f8] sm:$0xff]
      %v241 = vld [vmem:[%s1] sm:$0xff]
      %v242 = vld [vmem:[%s1 + $0x8] sm:$0xff]
      %vm243 = vcmask 130048
      %v245 = vsel %vm243, %v177, 0
      %v248 = vsel %vm243, %v178, 0
      %v251 = vsel %vm243, %v179, 0
      %v254 = vsel %vm243, %v180, 0
      %v257 = vsel %vm243, %v181, 0
      %v260 = vsel %vm243, %v182, 0
      %v263 = vsel %vm243, %v183, 0
      %v266 = vsel %vm243, %v184, 0
      %v269 = vsel %vm243, %v185, 0
      %v272 = vsel %vm243, %v186, 0
      %v275 = vsel %vm243, %v187, 0
      %v278 = vsel %vm243, %v188, 0
      %v281 = vsel %vm243, %v189, 0
      %v284 = vsel %vm243, %v190, 0
      %v287 = vsel %vm243, %v191, 0
      %v290 = vsel %vm243, %v192, 0
      %v293 = vsel %vm243, %v193, 0
      %v296 = vsel %vm243, %v194, 0
      %v299 = vsel %vm243, %v195, 0
      %v302 = vsel %vm243, %v196, 0
      %v305 = vsel %vm243, %v197, 0
      %v308 = vsel %vm243, %v198, 0
      %v311 = vsel %vm243, %v199, 0
      %v314 = vsel %vm243, %v200, 0
      %v317 = vsel %vm243, %v201, 0
      %v320 = vsel %vm243, %v202, 0
      %v323 = vsel %vm243, %v203, 0
      %v326 = vsel %vm243, %v204, 0
      %v329 = vsel %vm243, %v205, 0
      %v332 = vsel %vm243, %v206, 0
      %v335 = vsel %vm243, %v207, 0
      %v338 = vsel %vm243, %v208, 0
      %v341 = vsel %vm243, %v209, 0
      %v344 = vsel %vm243, %v210, 0
      %v347 = vsel %vm243, %v211, 0
      %v350 = vsel %vm243, %v212, 0
      %v353 = vsel %vm243, %v213, 0
      %v356 = vsel %vm243, %v214, 0
      %v359 = vsel %vm243, %v215, 0
      %v362 = vsel %vm243, %v216, 0
      %v365 = vsel %vm243, %v217, 0
      %v368 = vsel %vm243, %v218, 0
      %v371 = vsel %vm243, %v219, 0
      %v374 = vsel %vm243, %v220, 0
      %v377 = vsel %vm243, %v221, 0
      %v380 = vsel %vm243, %v222, 0
      %v383 = vsel %vm243, %v223, 0
      %v386 = vsel %vm243, %v224, 0
      %v389 = vsel %vm243, %v225, 0
      %v392 = vsel %vm243, %v226, 0
      %v395 = vsel %vm243, %v227, 0
      %v398 = vsel %vm243, %v228, 0
      %v401 = vsel %vm243, %v229, 0
      %v404 = vsel %vm243, %v230, 0
      %v407 = vsel %vm243, %v231, 0
      %v410 = vsel %vm243, %v232, 0
      %v413 = vsel %vm243, %v233, 0
      %v416 = vsel %vm243, %v234, 0
      %v419 = vsel %vm243, %v235, 0
      %v422 = vsel %vm243, %v236, 0
      %v425 = vsel %vm243, %v237, 0
      %v428 = vsel %vm243, %v238, 0
      %v431 = vsel %vm243, %v239, 0
      %v434 = vsel %vm243, %v240, 0
      %436 = vmatprep.subr.mxu0 0.0
      %437 = vmatpush1.msra.mxu0 %v241
      %438 = vmatprep.subr.mxu0 0.0
      %439 = vmatpush1.msra.mxu0 %v242
      %440 = vmatprep.subr.mxu0 0.0
      %441 = vmatpush1.msra.mxu0 0.0
      %442 = vmatprep.subr.mxu0 0.0
      %443 = vmatpush1.msra.mxu0 0.0
      %444 = vmatprep.subr.mxu0 0.0
      %445 = vmatpush1.msra.mxu0 0.0
      %446 = vmatprep.subr.mxu0 0.0
      %447 = vmatpush1.msra.mxu0 0.0
      %448 = vmatprep.subr.mxu0 0.0
      %449 = vmatpush1.msra.mxu0 0.0
      %450 = vmatprep.subr.mxu0 0.0
      %451 = vmatpush1.msra.mxu0 0.0
      %452 = vmatprep.subr.mxu0 0.0
      %453 = vmatpush1.msra.mxu0 0.0
      %454 = vmatprep.subr.mxu0 0.0
      %455 = vmatpush1.msra.mxu0 0.0
      %456 = vmatprep.subr.mxu0 0.0
      %457 = vmatpush1.msra.mxu0 0.0
      %458 = vmatprep.subr.mxu0 0.0
      %459 = vmatpush1.msra.mxu0 0.0
      %460 = vmatprep.subr.mxu0 0.0
      %461 = vmatpush1.msra.mxu0 0.0
      %462 = vmatprep.subr.mxu0 0.0
      %463 = vmatpush1.msra.mxu0 0.0
      %464 = vmatprep.subr.mxu0 0.0
      %465 = vmatpush1.msra.mxu0 0.0
      %466 = vmatprep.subr.mxu0 0.0
      %467 = vmatpush1.msra.mxu0 0.0
      %468 = vmatprep.subr.mxu0 0.0
      %469 = vmatpush1.msra.mxu0 0.0
      %470 = vmatprep.subr.mxu0 0.0
      %471 = vmatpush1.msra.mxu0 0.0
      %472 = vmatprep.subr.mxu0 0.0
      %473 = vmatpush1.msra.mxu0 0.0
      %474 = vmatprep.subr.mxu0 0.0
      %475 = vmatpush1.msra.mxu0 0.0
      %476 = vmatprep.subr.mxu0 0.0
      %477 = vmatpush1.msra.mxu0 0.0
      %478 = vmatprep.subr.mxu0 0.0
      %479 = vmatpush1.msra.mxu0 0.0
      %480 = vmatprep.subr.mxu0 0.0
      %481 = vmatpush1.msra.mxu0 0.0
      %482 = vmatprep.subr.mxu0 0.0
      %483 = vmatpush1.msra.mxu0 0.0
      %484 = vmatprep.subr.mxu0 0.0
      %485 = vmatpush1.msra.mxu0 0.0
      %486 = vmatprep.subr.mxu0 0.0
      %487 = vmatpush1.msra.mxu0 0.0
      %488 = vmatprep.subr.mxu0 0.0
      %489 = vmatpush1.msra.mxu0 0.0
      %490 = vmatprep.subr.mxu0 0.0
      %491 = vmatpush1.msra.mxu0 0.0
      %492 = vmatprep.subr.mxu0 0.0
      %493 = vmatpush1.msra.mxu0 0.0
      %494 = vmatprep.subr.mxu0 0.0
      %495 = vmatpush1.msra.mxu0 0.0
      %496 = vmatprep.subr.mxu0 0.0
      %497 = vmatpush1.msra.mxu0 0.0
      %498 = vmatprep.subr.mxu0 0.0
      %499 = vmatpush1.msra.mxu0 0.0
      %500 = vmatprep.mubr.f32.mxu0 0.0
      %501 = vmatmul.mubr.f32.gmra.mrb[0].mxu0 %v245
      %v502 = vpop.f32.mrb[0].mxu0
      %v503 = vadd.f32 0.0, %v502
      %v504 = vpop.f32.mrb[0].mxu0
      %505 = vmatprep.mubr.f32.mxu0 0.0
      %506 = vmatmul.mubr.f32.gmra.mrb[0].mxu0 %v248
      %v507 = vpop.f32.mrb[0].mxu0
      %v508 = vadd.f32 0.0, %v507
      %v509 = vpop.f32.mrb[0].mxu0
      %510 = vmatprep.mubr.f32.mxu0 0.0
      %511 = vmatmul.mubr.f32.gmra.mrb[0].mxu0 %v251
      %v512 = vpop.f32.mrb[0].mxu0
      %v513 = vadd.f32 0.0, %v512
      %v514 = vpop.f32.mrb[0].mxu0
      %515 = vmatprep.mubr.f32.mxu0 0.0
      %516 = vmatmul.mubr.f32.gmra.mrb[0].mxu0 %v254
      %v517 = vpop.f32.mrb[0].mxu0
      %v518 = vadd.f32 0.0, %v517
      %v519 = vpop.f32.mrb[0].mxu0
      %520 = vmatprep.mubr.f32.mxu0 0.0
      %521 = vmatmul.mubr.f32.gmra.mrb[0].mxu0 %v257
      %v522 = vpop.f32.mrb[0].mxu0
      %v523 = vadd.f32 0.0, %v522
      %v524 = vpop.f32.mrb[0].mxu0
      %525 = vmatprep.mubr.f32.mxu0 0.0
      %526 = vmatmul.mubr.f32.gmra.mrb[0].mxu0 %v260
      %v527 = vpop.f32.mrb[0].mxu0
      %v528 = vadd.f32 0.0, %v527
      %v529 = vpop.f32.mrb[0].mxu0
      %530 = vmatprep.mubr.f32.mxu0 0.0
      %531 = vmatmul.mubr.f32.gmra.mrb[0].mxu0 %v263
      %v532 = vpop.f32.mrb[0].mxu0
      %v533 = vadd.f32 0.0, %v532
      %v534 = vpop.f32.mrb[0].mxu0
      %535 = vmatprep.mubr.f32.mxu0 0.0
      %536 = vmatmul.mubr.f32.gmra.mrb[0].mxu0 %v266
      %v537 = vpop.f32.mrb[0].mxu0
      %v538 = vadd.f32 0.0, %v537
      %v539 = vpop.f32.mrb[0].mxu0
      %540 = vmatprep.mubr.f32.mxu0 0.0
      %541 = vmatmul.mubr.f32.gmra.mrb[0].mxu0 %v269
      %v542 = vpop.f32.mrb[0].mxu0
      %v543 = vadd.f32 0.0, %v542
      %v544 = vpop.f32.mrb[0].mxu0
      %545 = vmatprep.mubr.f32.mxu0 0.0
      %546 = vmatmul.mubr.f32.gmra.mrb[0].mxu0 %v272
      %v547 = vpop.f32.mrb[0].mxu0
      %v548 = vadd.f32 0.0, %v547
      %v549 = vpop.f32.mrb[0].mxu0
      %550 = vmatprep.mubr.f32.mxu0 0.0
      %551 = vmatmul.mubr.f32.gmra.mrb[0].mxu0 %v275
      %v552 = vpop.f32.mrb[0].mxu0
      %v553 = vadd.f32 0.0, %v552
      %v554 = vpop.f32.mrb[0].mxu0
      %555 = vmatprep.mubr.f32.mxu0 0.0
      %556 = vmatmul.mubr.f32.gmra.mrb[0].mxu0 %v278
      %v557 = vpop.f32.mrb[0].mxu0
      %v558 = vadd.f32 0.0, %v557
      %v559 = vpop.f32.mrb[0].mxu0
      %560 = vmatprep.mubr.f32.mxu0 0.0
      %561 = vmatmul.mubr.f32.gmra.mrb[0].mxu0 %v281
      %v562 = vpop.f32.mrb[0].mxu0
      %v563 = vadd.f32 0.0, %v562
      %v564 = vpop.f32.mrb[0].mxu0
      %565 = vmatprep.mubr.f32.mxu0 0.0
      %566 = vmatmul.mubr.f32.gmra.mrb[0].mxu0 %v284
      %v567 = vpop.f32.mrb[0].mxu0
      %v568 = vadd.f32 0.0, %v567
      %v569 = vpop.f32.mrb[0].mxu0
      %570 = vmatprep.mubr.f32.mxu0 0.0
      %571 = vmatmul.mubr.f32.gmra.mrb[0].mxu0 %v287
      %v572 = vpop.f32.mrb[0].mxu0
      %v573 = vadd.f32 0.0, %v572
      %v574 = vpop.f32.mrb[0].mxu0
      %575 = vmatprep.mubr.f32.mxu0 0.0
      %576 = vmatmul.mubr.f32.gmra.mrb[0].mxu0 %v290
      %v577 = vpop.f32.mrb[0].mxu0
      %v578 = vadd.f32 0.0, %v577
      %v579 = vpop.f32.mrb[0].mxu0
      %580 = vmatprep.mubr.f32.mxu0 0.0
      %581 = vmatmul.mubr.f32.gmra.mrb[0].mxu0 %v293
      %v582 = vpop.f32.mrb[0].mxu0
      %v583 = vadd.f32 0.0, %v582
      %v584 = vpop.f32.mrb[0].mxu0
      %585 = vmatprep.mubr.f32.mxu0 0.0
      %586 = vmatmul.mubr.f32.gmra.mrb[0].mxu0 %v296
      %v587 = vpop.f32.mrb[0].mxu0
      %v588 = vadd.f32 0.0, %v587
      %v589 = vpop.f32.mrb[0].mxu0
      %590 = vmatprep.mubr.f32.mxu0 0.0
      %591 = vmatmul.mubr.f32.gmra.mrb[0].mxu0 %v299
      %v592 = vpop.f32.mrb[0].mxu0
      %v593 = vadd.f32 0.0, %v592
      %v594 = vpop.f32.mrb[0].mxu0
      %595 = vmatprep.mubr.f32.mxu0 0.0
      %596 = vmatmul.mubr.f32.gmra.mrb[0].mxu0 %v302
      %v597 = vpop.f32.mrb[0].mxu0
      %v598 = vadd.f32 0.0, %v597
      %v599 = vpop.f32.mrb[0].mxu0
      %600 = vmatprep.mubr.f32.mxu0 0.0
      %601 = vmatmul.mubr.f32.gmra.mrb[0].mxu0 %v305
      %v602 = vpop.f32.mrb[0].mxu0
      %v603 = vadd.f32 0.0, %v602
      %v604 = vpop.f32.mrb[0].mxu0
      %605 = vmatprep.mubr.f32.mxu0 0.0
      %606 = vmatmul.mubr.f32.gmra.mrb[0].mxu0 %v308
      %v607 = vpop.f32.mrb[0].mxu0
      %v608 = vadd.f32 0.0, %v607
      %v609 = vpop.f32.mrb[0].mxu0
      %610 = vmatprep.mubr.f32.mxu0 0.0
      %611 = vmatmul.mubr.f32.gmra.mrb[0].mxu0 %v311
      %v612 = vpop.f32.mrb[0].mxu0
      %v613 = vadd.f32 0.0, %v612
      %v614 = vpop.f32.mrb[0].mxu0
      %615 = vmatprep.mubr.f32.mxu0 0.0
      %616 = vmatmul.mubr.f32.gmra.mrb[0].mxu0 %v314
      %v617 = vpop.f32.mrb[0].mxu0
      %v618 = vadd.f32 0.0, %v617
      %v619 = vpop.f32.mrb[0].mxu0
      %620 = vmatprep.mubr.f32.mxu0 0.0
      %621 = vmatmul.mubr.f32.gmra.mrb[0].mxu0 %v317
      %v622 = vpop.f32.mrb[0].mxu0
      %v623 = vadd.f32 0.0, %v622
      %v624 = vpop.f32.mrb[0].mxu0
      %625 = vmatprep.mubr.f32.mxu0 0.0
      %626 = vmatmul.mubr.f32.gmra.mrb[0].mxu0 %v320
      %v627 = vpop.f32.mrb[0].mxu0
      %v628 = vadd.f32 0.0, %v627
      %v629 = vpop.f32.mrb[0].mxu0
      %630 = vmatprep.mubr.f32.mxu0 0.0
      %631 = vmatmul.mubr.f32.gmra.mrb[0].mxu0 %v323
      %v632 = vpop.f32.mrb[0].mxu0
      %v633 = vadd.f32 0.0, %v632
      %v634 = vpop.f32.mrb[0].mxu0
      %635 = vmatprep.mubr.f32.mxu0 0.0
      %636 = vmatmul.mubr.f32.gmra.mrb[0].mxu0 %v326
      %v637 = vpop.f32.mrb[0].mxu0
      %v638 = vadd.f32 0.0, %v637
      %v639 = vpop.f32.mrb[0].mxu0
      %640 = vmatprep.mubr.f32.mxu0 0.0
      %641 = vmatmul.mubr.f32.gmra.mrb[0].mxu0 %v329
      %v642 = vpop.f32.mrb[0].mxu0
      %v643 = vadd.f32 0.0, %v642
      %v644 = vpop.f32.mrb[0].mxu0
      %645 = vmatprep.mubr.f32.mxu0 0.0
      %646 = vmatmul.mubr.f32.gmra.mrb[0].mxu0 %v332
      %v647 = vpop.f32.mrb[0].mxu0
      %v648 = vadd.f32 0.0, %v647
      %v649 = vpop.f32.mrb[0].mxu0
      %650 = vmatprep.mubr.f32.mxu0 0.0
      %651 = vmatmul.mubr.f32.gmra.mrb[0].mxu0 %v335
      %v652 = vpop.f32.mrb[0].mxu0
      %v653 = vadd.f32 0.0, %v652
      %v654 = vpop.f32.mrb[0].mxu0
      %655 = vmatprep.mubr.f32.mxu0 0.0
      %656 = vmatmul.mubr.f32.gmra.mrb[0].mxu0 %v338
      %v657 = vpop.f32.mrb[0].mxu0
      %v658 = vadd.f32 0.0, %v657
      %v659 = vpop.f32.mrb[0].mxu0
      %660 = vmatprep.mubr.f32.mxu0 0.0
      %661 = vmatmul.mubr.f32.gmra.mrb[0].mxu0 %v341
      %v662 = vpop.f32.mrb[0].mxu0
      %v663 = vadd.f32 0.0, %v662
      %v664 = vpop.f32.mrb[0].mxu0
      %665 = vmatprep.mubr.f32.mxu0 0.0
      %666 = vmatmul.mubr.f32.gmra.mrb[0].mxu0 %v344
      %v667 = vpop.f32.mrb[0].mxu0
      %v668 = vadd.f32 0.0, %v667
      %v669 = vpop.f32.mrb[0].mxu0
      %670 = vmatprep.mubr.f32.mxu0 0.0
      %671 = vmatmul.mubr.f32.gmra.mrb[0].mxu0 %v347
      %v672 = vpop.f32.mrb[0].mxu0
      %v673 = vadd.f32 0.0, %v672
      %v674 = vpop.f32.mrb[0].mxu0
      %675 = vmatprep.mubr.f32.mxu0 0.0
      %676 = vmatmul.mubr.f32.gmra.mrb[0].mxu0 %v350
      %v677 = vpop.f32.mrb[0].mxu0
      %v678 = vadd.f32 0.0, %v677
      %v679 = vpop.f32.mrb[0].mxu0
      %680 = vmatprep.mubr.f32.mxu0 0.0
      %681 = vmatmul.mubr.f32.gmra.mrb[0].mxu0 %v353
      %v682 = vpop.f32.mrb[0].mxu0
      %v683 = vadd.f32 0.0, %v682
      %v684 = vpop.f32.mrb[0].mxu0
      %685 = vmatprep.mubr.f32.mxu0 0.0
      %686 = vmatmul.mubr.f32.gmra.mrb[0].mxu0 %v356
      %v687 = vpop.f32.mrb[0].mxu0
      %v688 = vadd.f32 0.0, %v687
      %v689 = vpop.f32.mrb[0].mxu0
      %690 = vmatprep.mubr.f32.mxu0 0.0
      %691 = vmatmul.mubr.f32.gmra.mrb[0].mxu0 %v359
      %v692 = vpop.f32.mrb[0].mxu0
      %v693 = vadd.f32 0.0, %v692
      %v694 = vpop.f32.mrb[0].mxu0
      %695 = vmatprep.mubr.f32.mxu0 0.0
      %696 = vmatmul.mubr.f32.gmra.mrb[0].mxu0 %v362
      %v697 = vpop.f32.mrb[0].mxu0
      %v698 = vadd.f32 0.0, %v697
      %v699 = vpop.f32.mrb[0].mxu0
      %700 = vmatprep.mubr.f32.mxu0 0.0
      %701 = vmatmul.mubr.f32.gmra.mrb[0].mxu0 %v365
      %v702 = vpop.f32.mrb[0].mxu0
      %v703 = vadd.f32 0.0, %v702
      %v704 = vpop.f32.mrb[0].mxu0
      %705 = vmatprep.mubr.f32.mxu0 0.0
      %706 = vmatmul.mubr.f32.gmra.mrb[0].mxu0 %v368
      %v707 = vpop.f32.mrb[0].mxu0
      %v708 = vadd.f32 0.0, %v707
      %v709 = vpop.f32.mrb[0].mxu0
      %710 = vmatprep.mubr.f32.mxu0 0.0
      %711 = vmatmul.mubr.f32.gmra.mrb[0].mxu0 %v371
      %v712 = vpop.f32.mrb[0].mxu0
      %v713 = vadd.f32 0.0, %v712
      %v714 = vpop.f32.mrb[0].mxu0
      %715 = vmatprep.mubr.f32.mxu0 0.0
      %716 = vmatmul.mubr.f32.gmra.mrb[0].mxu0 %v374
      %v717 = vpop.f32.mrb[0].mxu0
      %v718 = vadd.f32 0.0, %v717
      %v719 = vpop.f32.mrb[0].mxu0
      %720 = vmatprep.mubr.f32.mxu0 0.0
      %721 = vmatmul.mubr.f32.gmra.mrb[0].mxu0 %v377
      %v722 = vpop.f32.mrb[0].mxu0
      %v723 = vadd.f32 0.0, %v722
      %v724 = vpop.f32.mrb[0].mxu0
      %725 = vmatprep.mubr.f32.mxu0 0.0
      %726 = vmatmul.mubr.f32.gmra.mrb[0].mxu0 %v380
      %v727 = vpop.f32.mrb[0].mxu0
      %v728 = vadd.f32 0.0, %v727
      %v729 = vpop.f32.mrb[0].mxu0
      %730 = vmatprep.mubr.f32.mxu0 0.0
      %731 = vmatmul.mubr.f32.gmra.mrb[0].mxu0 %v383
      %v732 = vpop.f32.mrb[0].mxu0
      %v733 = vadd.f32 0.0, %v732
      %v734 = vpop.f32.mrb[0].mxu0
      %735 = vmatprep.mubr.f32.mxu0 0.0
      %736 = vmatmul.mubr.f32.gmra.mrb[0].mxu0 %v386
      %v737 = vpop.f32.mrb[0].mxu0
      %v738 = vadd.f32 0.0, %v737
      %v739 = vpop.f32.mrb[0].mxu0
      %740 = vmatprep.mubr.f32.mxu0 0.0
      %741 = vmatmul.mubr.f32.gmra.mrb[0].mxu0 %v389
      %v742 = vpop.f32.mrb[0].mxu0
      %v743 = vadd.f32 0.0, %v742
      %v744 = vpop.f32.mrb[0].mxu0
      %745 = vmatprep.mubr.f32.mxu0 0.0
      %746 = vmatmul.mubr.f32.gmra.mrb[0].mxu0 %v392
      %v747 = vpop.f32.mrb[0].mxu0
      %v748 = vadd.f32 0.0, %v747
      %v749 = vpop.f32.mrb[0].mxu0
      %750 = vmatprep.mubr.f32.mxu0 0.0
      %751 = vmatmul.mubr.f32.gmra.mrb[0].mxu0 %v395
      %v752 = vpop.f32.mrb[0].mxu0
      %v753 = vadd.f32 0.0, %v752
      %v754 = vpop.f32.mrb[0].mxu0
      %755 = vmatprep.mubr.f32.mxu0 0.0
      %756 = vmatmul.mubr.f32.gmra.mrb[0].mxu0 %v398
      %v757 = vpop.f32.mrb[0].mxu0
      %v758 = vadd.f32 0.0, %v757
      %v759 = vpop.f32.mrb[0].mxu0
      %760 = vmatprep.mubr.f32.mxu0 0.0
      %761 = vmatmul.mubr.f32.gmra.mrb[0].mxu0 %v401
      %v762 = vpop.f32.mrb[0].mxu0
      %v763 = vadd.f32 0.0, %v762
      %v764 = vpop.f32.mrb[0].mxu0
      %765 = vmatprep.mubr.f32.mxu0 0.0
      %766 = vmatmul.mubr.f32.gmra.mrb[0].mxu0 %v404
      %v767 = vpop.f32.mrb[0].mxu0
      %v768 = vadd.f32 0.0, %v767
      %v769 = vpop.f32.mrb[0].mxu0
      %770 = vmatprep.mubr.f32.mxu0 0.0
      %771 = vmatmul.mubr.f32.gmra.mrb[0].mxu0 %v407
      %v772 = vpop.f32.mrb[0].mxu0
      %v773 = vadd.f32 0.0, %v772
      %v774 = vpop.f32.mrb[0].mxu0
      %775 = vmatprep.mubr.f32.mxu0 0.0
      %776 = vmatmul.mubr.f32.gmra.mrb[0].mxu0 %v410
      %v777 = vpop.f32.mrb[0].mxu0
      %v778 = vadd.f32 0.0, %v777
      %v779 = vpop.f32.mrb[0].mxu0
      %780 = vmatprep.mubr.f32.mxu0 0.0
      %781 = vmatmul.mubr.f32.gmra.mrb[0].mxu0 %v413
      %v782 = vpop.f32.mrb[0].mxu0
      %v783 = vadd.f32 0.0, %v782
      %v784 = vpop.f32.mrb[0].mxu0
      %785 = vmatprep.mubr.f32.mxu0 0.0
      %786 = vmatmul.mubr.f32.gmra.mrb[0].mxu0 %v416
      %v787 = vpop.f32.mrb[0].mxu0
      %v788 = vadd.f32 0.0, %v787
      %v789 = vpop.f32.mrb[0].mxu0
      %790 = vmatprep.mubr.f32.mxu0 0.0
      %791 = vmatmul.mubr.f32.gmra.mrb[0].mxu0 %v419
      %v792 = vpop.f32.mrb[0].mxu0
      %v793 = vadd.f32 0.0, %v792
      %v794 = vpop.f32.mrb[0].mxu0
      %795 = vmatprep.mubr.f32.mxu0 0.0
      %796 = vmatmul.mubr.f32.gmra.mrb[0].mxu0 %v422
      %v797 = vpop.f32.mrb[0].mxu0
      %v798 = vadd.f32 0.0, %v797
      %v799 = vpop.f32.mrb[0].mxu0
      %800 = vmatprep.mubr.f32.mxu0 0.0
      %801 = vmatmul.mubr.f32.gmra.mrb[0].mxu0 %v425
      %v802 = vpop.f32.mrb[0].mxu0
      %v803 = vadd.f32 0.0, %v802
      %v804 = vpop.f32.mrb[0].mxu0
      %805 = vmatprep.mubr.f32.mxu0 0.0
      %806 = vmatmul.mubr.f32.gmra.mrb[0].mxu0 %v428
      %v807 = vpop.f32.mrb[0].mxu0
      %v808 = vadd.f32 0.0, %v807
      %v809 = vpop.f32.mrb[0].mxu0
      %810 = vmatprep.mubr.f32.mxu0 0.0
      %811 = vmatmul.mubr.f32.gmra.mrb[0].mxu0 %v431
      %v812 = vpop.f32.mrb[0].mxu0
      %v813 = vadd.f32 0.0, %v812
      %v814 = vpop.f32.mrb[0].mxu0
      %815 = vmatprep.mubr.f32.mxu0 0.0
      %816 = vmatmul.mubr.f32.gmra.mrb[0].mxu0 %v434
      %v817 = vpop.f32.mrb[0].mxu0
      %v818 = vadd.f32 0.0, %v817
      %v819 = vpop.f32.mrb[0].mxu0
      %820 = vdwg.mxu0
      %v821 = vld [vmem:[%s2] sm:$0x1]
      %v822 = vmax.f32 %v503, 0.0
      %v823 = vmax.f32 %v508, 0.0
      %v824 = vmax.f32 %v513, 0.0
      %v825 = vmax.f32 %v518, 0.0
      %v826 = vmax.f32 %v523, 0.0
      %v827 = vmax.f32 %v528, 0.0
      %v828 = vmax.f32 %v533, 0.0
      %v829 = vmax.f32 %v538, 0.0
      %v830 = vmax.f32 %v543, 0.0
      %v831 = vmax.f32 %v548, 0.0
      %v832 = vmax.f32 %v553, 0.0
      %v833 = vmax.f32 %v558, 0.0
      %v834 = vmax.f32 %v563, 0.0
      %v835 = vmax.f32 %v568, 0.0
      %v836 = vmax.f32 %v573, 0.0
      %v837 = vmax.f32 %v578, 0.0
      %v838 = vmax.f32 %v583, 0.0
      %v839 = vmax.f32 %v588, 0.0
      %v840 = vmax.f32 %v593, 0.0
      %v841 = vmax.f32 %v598, 0.0
      %v842 = vmax.f32 %v603, 0.0
      %v843 = vmax.f32 %v608, 0.0
      %v844 = vmax.f32 %v613, 0.0
      %v845 = vmax.f32 %v618, 0.0
      %v846 = vmax.f32 %v623, 0.0
      %v847 = vmax.f32 %v628, 0.0
      %v848 = vmax.f32 %v633, 0.0
      %v849 = vmax.f32 %v638, 0.0
      %v850 = vmax.f32 %v643, 0.0
      %v851 = vmax.f32 %v648, 0.0
      %v852 = vmax.f32 %v653, 0.0
      %v853 = vmax.f32 %v658, 0.0
      %v854 = vmax.f32 %v663, 0.0
      %v855 = vmax.f32 %v668, 0.0
      %v856 = vmax.f32 %v673, 0.0
      %v857 = vmax.f32 %v678, 0.0
      %v858 = vmax.f32 %v683, 0.0
      %v859 = vmax.f32 %v688, 0.0
      %v860 = vmax.f32 %v693, 0.0
      %v861 = vmax.f32 %v698, 0.0
      %v862 = vmax.f32 %v703, 0.0
      %v863 = vmax.f32 %v708, 0.0
      %v864 = vmax.f32 %v713, 0.0
      %v865 = vmax.f32 %v718, 0.0
      %v866 = vmax.f32 %v723, 0.0
      %v867 = vmax.f32 %v728, 0.0
      %v868 = vmax.f32 %v733, 0.0
      %v869 = vmax.f32 %v738, 0.0
      %v870 = vmax.f32 %v743, 0.0
      %v871 = vmax.f32 %v748, 0.0
      %v872 = vmax.f32 %v753, 0.0
      %v873 = vmax.f32 %v758, 0.0
      %v874 = vmax.f32 %v763, 0.0
      %v875 = vmax.f32 %v768, 0.0
      %v876 = vmax.f32 %v773, 0.0
      %v877 = vmax.f32 %v778, 0.0
      %v878 = vmax.f32 %v783, 0.0
      %v879 = vmax.f32 %v788, 0.0
      %v880 = vmax.f32 %v793, 0.0
      %v881 = vmax.f32 %v798, 0.0
      %v882 = vmax.f32 %v803, 0.0
      %v883 = vmax.f32 %v808, 0.0
      %v884 = vmax.f32 %v813, 0.0
      %v885 = vmax.f32 %v818, 0.0
      %v886 = vsub.f32 0.0, %v822
      %v887 = vsub.f32 0.0, %v823
      %v888 = vsub.f32 0.0, %v824
      %v889 = vsub.f32 0.0, %v825
      %v890 = vsub.f32 0.0, %v826
      %v891 = vsub.f32 0.0, %v827
      %v892 = vsub.f32 0.0, %v828
      %v893 = vsub.f32 0.0, %v829
      %v894 = vsub.f32 0.0, %v830
      %v895 = vsub.f32 0.0, %v831
      %v896 = vsub.f32 0.0, %v832
      %v897 = vsub.f32 0.0, %v833
      %v898 = vsub.f32 0.0, %v834
      %v899 = vsub.f32 0.0, %v835
      %v900 = vsub.f32 0.0, %v836
      %v901 = vsub.f32 0.0, %v837
      %v902 = vsub.f32 0.0, %v838
      %v903 = vsub.f32 0.0, %v839
      %v904 = vsub.f32 0.0, %v840
      %v905 = vsub.f32 0.0, %v841
      %v906 = vsub.f32 0.0, %v842
      %v907 = vsub.f32 0.0, %v843
      %v908 = vsub.f32 0.0, %v844
      %v909 = vsub.f32 0.0, %v845
      %v910 = vsub.f32 0.0, %v846
      %v911 = vsub.f32 0.0, %v847
      %v912 = vsub.f32 0.0, %v848
      %v913 = vsub.f32 0.0, %v849
      %v914 = vsub.f32 0.0, %v850
      %v915 = vsub.f32 0.0, %v851
      %v916 = vsub.f32 0.0, %v852
      %v917 = vsub.f32 0.0, %v853
      %v918 = vsub.f32 0.0, %v854
      %v919 = vsub.f32 0.0, %v855
      %v920 = vsub.f32 0.0, %v856
      %v921 = vsub.f32 0.0, %v857
      %v922 = vsub.f32 0.0, %v858
      %v923 = vsub.f32 0.0, %v859
      %v924 = vsub.f32 0.0, %v860
      %v925 = vsub.f32 0.0, %v861
      %v926 = vsub.f32 0.0, %v862
      %v927 = vsub.f32 0.0, %v863
      %v928 = vsub.f32 0.0, %v864
      %v929 = vsub.f32 0.0, %v865
      %v930 = vsub.f32 0.0, %v866
      %v931 = vsub.f32 0.0, %v867
      %v932 = vsub.f32 0.0, %v868
      %v933 = vsub.f32 0.0, %v869
      %v934 = vsub.f32 0.0, %v870
      %v935 = vsub.f32 0.0, %v871
      %v936 = vsub.f32 0.0, %v872
      %v937 = vsub.f32 0.0, %v873
      %v938 = vsub.f32 0.0, %v874
      %v939 = vsub.f32 0.0, %v875
      %v940 = vsub.f32 0.0, %v876
      %v941 = vsub.f32 0.0, %v877
      %v942 = vsub.f32 0.0, %v878
      %v943 = vsub.f32 0.0, %v879
      %v944 = vsub.f32 0.0, %v880
      %v945 = vsub.f32 0.0, %v881
      %v946 = vsub.f32 0.0, %v882
      %v947 = vsub.f32 0.0, %v883
      %v948 = vsub.f32 0.0, %v884
      %v949 = vsub.f32 0.0, %v885
      %v950 = vmul.f32 %v886, 1.442695
      %v951 = vpow.pop %v950
      %v952 = vmul.f32 %v887, 1.442695
      %v953 = vpow.pop %v952
      %v954 = vmul.f32 %v888, 1.442695
      %v955 = vpow.pop %v954
      %v956 = vmul.f32 %v889, 1.442695
      %v957 = vpow.pop %v956
      %v958 = vmul.f32 %v890, 1.442695
      %v959 = vpow.pop %v958
      %v960 = vmul.f32 %v891, 1.442695
      %v961 = vpow.pop %v960
      %v962 = vmul.f32 %v892, 1.442695
      %v963 = vpow.pop %v962
      %v964 = vmul.f32 %v893, 1.442695
      %v965 = vpow.pop %v964
      %v966 = vmul.f32 %v894, 1.442695
      %v967 = vpow.pop %v966
      %v968 = vmul.f32 %v895, 1.442695
      %v969 = vpow.pop %v968
      %v970 = vmul.f32 %v896, 1.442695
      %v971 = vpow.pop %v970
      %v972 = vmul.f32 %v897, 1.442695
      %v973 = vpow.pop %v972
      %v974 = vmul.f32 %v898, 1.442695
      %v975 = vpow.pop %v974
      %v976 = vmul.f32 %v899, 1.442695
      %v977 = vpow.pop %v976
      %v978 = vmul.f32 %v900, 1.442695
      %v979 = vpow.pop %v978
      %v980 = vmul.f32 %v901, 1.442695
      %v981 = vpow.pop %v980
      %v982 = vmul.f32 %v902, 1.442695
      %v983 = vpow.pop %v982
      %v984 = vmul.f32 %v903, 1.442695
      %v985 = vpow.pop %v984
      %v986 = vmul.f32 %v904, 1.442695
      %v987 = vpow.pop %v986
      %v988 = vmul.f32 %v905, 1.442695
      %v989 = vpow.pop %v988
      %v990 = vmul.f32 %v906, 1.442695
      %v991 = vpow.pop %v990
      %v992 = vmul.f32 %v907, 1.442695
      %v993 = vpow.pop %v992
      %v994 = vmul.f32 %v908, 1.442695
      %v995 = vpow.pop %v994
      %v996 = vmul.f32 %v909, 1.442695
      %v997 = vpow.pop %v996
      %v998 = vmul.f32 %v910, 1.442695
      %v999 = vpow.pop %v998
      %v1000 = vmul.f32 %v911, 1.442695
      %v1001 = vpow.pop %v1000
      %v1002 = vmul.f32 %v912, 1.442695
      %v1003 = vpow.pop %v1002
      %v1004 = vmul.f32 %v913, 1.442695
      %v1005 = vpow.pop %v1004
      %v1006 = vmul.f32 %v914, 1.442695
      %v1007 = vpow.pop %v1006
      %v1008 = vmul.f32 %v915, 1.442695
      %v1009 = vpow.pop %v1008
      %v1010 = vmul.f32 %v916, 1.442695
      %v1011 = vpow.pop %v1010
      %v1012 = vmul.f32 %v917, 1.442695
      %v1013 = vpow.pop %v1012
      %v1014 = vmul.f32 %v918, 1.442695
      %v1015 = vpow.pop %v1014
      %v1016 = vmul.f32 %v919, 1.442695
      %v1017 = vpow.pop %v1016
      %v1018 = vmul.f32 %v920, 1.442695
      %v1019 = vpow.pop %v1018
      %v1020 = vmul.f32 %v921, 1.442695
      %v1021 = vpow.pop %v1020
      %v1022 = vmul.f32 %v922, 1.442695
      %v1023 = vpow.pop %v1022
      %v1024 = vmul.f32 %v923, 1.442695
      %v1025 = vpow.pop %v1024
      %v1026 = vmul.f32 %v924, 1.442695
      %v1027 = vpow.pop %v1026
      %v1028 = vmul.f32 %v925, 1.442695
      %v1029 = vpow.pop %v1028
      %v1030 = vmul.f32 %v926, 1.442695
      %v1031 = vpow.pop %v1030
      %v1032 = vmul.f32 %v927, 1.442695
      %v1033 = vpow.pop %v1032
      %v1034 = vmul.f32 %v928, 1.442695
      %v1035 = vpow.pop %v1034
      %v1036 = vmul.f32 %v929, 1.442695
      %v1037 = vpow.pop %v1036
      %v1038 = vmul.f32 %v930, 1.442695
      %v1039 = vpow.pop %v1038
      %v1040 = vmul.f32 %v931, 1.442695
      %v1041 = vpow.pop %v1040
      %v1042 = vmul.f32 %v932, 1.442695
      %v1043 = vpow.pop %v1042
      %v1044 = vmul.f32 %v933, 1.442695
      %v1045 = vpow.pop %v1044
      %v1046 = vmul.f32 %v934, 1.442695
      %v1047 = vpow.pop %v1046
      %v1048 = vmul.f32 %v935, 1.442695
      %v1049 = vpow.pop %v1048
      %v1050 = vmul.f32 %v936, 1.442695
      %v1051 = vpow.pop %v1050
      %v1052 = vmul.f32 %v937, 1.442695
      %v1053 = vpow.pop %v1052
      %v1054 = vmul.f32 %v938, 1.442695
      %v1055 = vpow.pop %v1054
      %v1056 = vmul.f32 %v939, 1.442695
      %v1057 = vpow.pop %v1056
      %v1058 = vmul.f32 %v940, 1.442695
      %v1059 = vpow.pop %v1058
      %v1060 = vmul.f32 %v941, 1.442695
      %v1061 = vpow.pop %v1060
      %v1062 = vmul.f32 %v942, 1.442695
      %v1063 = vpow.pop %v1062
      %v1064 = vmul.f32 %v943, 1.442695
      %v1065 = vpow.pop %v1064
      %v1066 = vmul.f32 %v944, 1.442695
      %v1067 = vpow.pop %v1066
      %v1068 = vmul.f32 %v945, 1.442695
      %v1069 = vpow.pop %v1068
      %v1070 = vmul.f32 %v946, 1.442695
      %v1071 = vpow.pop %v1070
      %v1072 = vmul.f32 %v947, 1.442695
      %v1073 = vpow.pop %v1072
      %v1074 = vmul.f32 %v948, 1.442695
      %v1075 = vpow.pop %v1074
      %v1076 = vmul.f32 %v949, 1.442695
      %v1077 = vpow.pop %v1076
      %v1078 = vadd.f32 %v951, 1.0
      %v1079 = vadd.f32 %v953, 1.0
      %v1080 = vadd.f32 %v955, 1.0
      %v1081 = vadd.f32 %v957, 1.0
      %v1082 = vadd.f32 %v959, 1.0
      %v1083 = vadd.f32 %v961, 1.0
      %v1084 = vadd.f32 %v963, 1.0
      %v1085 = vadd.f32 %v965, 1.0
      %v1086 = vadd.f32 %v967, 1.0
      %v1087 = vadd.f32 %v969, 1.0
      %v1088 = vadd.f32 %v971, 1.0
      %v1089 = vadd.f32 %v973, 1.0
      %v1090 = vadd.f32 %v975, 1.0
      %v1091 = vadd.f32 %v977, 1.0
      %v1092 = vadd.f32 %v979, 1.0
      %v1093 = vadd.f32 %v981, 1.0
      %v1094 = vadd.f32 %v983, 1.0
      %v1095 = vadd.f32 %v985, 1.0
      %v1096 = vadd.f32 %v987, 1.0
      %v1097 = vadd.f32 %v989, 1.0
      %v1098 = vadd.f32 %v991, 1.0
      %v1099 = vadd.f32 %v993, 1.0
      %v1100 = vadd.f32 %v995, 1.0
      %v1101 = vadd.f32 %v997, 1.0
      %v1102 = vadd.f32 %v999, 1.0
      %v1103 = vadd.f32 %v1001, 1.0
      %v1104 = vadd.f32 %v1003, 1.0
      %v1105 = vadd.f32 %v1005, 1.0
      %v1106 = vadd.f32 %v1007, 1.0
      %v1107 = vadd.f32 %v1009, 1.0
      %v1108 = vadd.f32 %v1011, 1.0
      %v1109 = vadd.f32 %v1013, 1.0
      %v1110 = vadd.f32 %v1015, 1.0
      %v1111 = vadd.f32 %v1017, 1.0
      %v1112 = vadd.f32 %v1019, 1.0
      %v1113 = vadd.f32 %v1021, 1.0
      %v1114 = vadd.f32 %v1023, 1.0
      %v1115 = vadd.f32 %v1025, 1.0
      %v1116 = vadd.f32 %v1027, 1.0
      %v1117 = vadd.f32 %v1029, 1.0
      %v1118 = vadd.f32 %v1031, 1.0
      %v1119 = vadd.f32 %v1033, 1.0
      %v1120 = vadd.f32 %v1035, 1.0
      %v1121 = vadd.f32 %v1037, 1.0
      %v1122 = vadd.f32 %v1039, 1.0
      %v1123 = vadd.f32 %v1041, 1.0
      %v1124 = vadd.f32 %v1043, 1.0
      %v1125 = vadd.f32 %v1045, 1.0
      %v1126 = vadd.f32 %v1047, 1.0
      %v1127 = vadd.f32 %v1049, 1.0
      %v1128 = vadd.f32 %v1051, 1.0
      %v1129 = vadd.f32 %v1053, 1.0
      %v1130 = vadd.f32 %v1055, 1.0
      %v1131 = vadd.f32 %v1057, 1.0
      %v1132 = vadd.f32 %v1059, 1.0
      %v1133 = vadd.f32 %v1061, 1.0
      %v1134 = vadd.f32 %v1063, 1.0
      %v1135 = vadd.f32 %v1065, 1.0
      %v1136 = vadd.f32 %v1067, 1.0
      %v1137 = vadd.f32 %v1069, 1.0
      %v1138 = vadd.f32 %v1071, 1.0
      %v1139 = vadd.f32 %v1073, 1.0
      %v1140 = vadd.f32 %v1075, 1.0
      %v1141 = vadd.f32 %v1077, 1.0
      %v1142 = vrcp.pop %v1078
      %v1143 = vrcp.pop %v1079
      %v1144 = vrcp.pop %v1080
      %v1145 = vrcp.pop %v1081
      %v1146 = vrcp.pop %v1082
      %v1147 = vrcp.pop %v1083
      %v1148 = vrcp.pop %v1084
      %v1149 = vrcp.pop %v1085
      %v1150 = vrcp.pop %v1086
      %v1151 = vrcp.pop %v1087
      %v1152 = vrcp.pop %v1088
      %v1153 = vrcp.pop %v1089
      %v1154 = vrcp.pop %v1090
      %v1155 = vrcp.pop %v1091
      %v1156 = vrcp.pop %v1092
      %v1157 = vrcp.pop %v1093
      %v1158 = vrcp.pop %v1094
      %v1159 = vrcp.pop %v1095
      %v1160 = vrcp.pop %v1096
      %v1161 = vrcp.pop %v1097
      %v1162 = vrcp.pop %v1098
      %v1163 = vrcp.pop %v1099
      %v1164 = vrcp.pop %v1100
      %v1165 = vrcp.pop %v1101
      %v1166 = vrcp.pop %v1102
      %v1167 = vrcp.pop %v1103
      %v1168 = vrcp.pop %v1104
      %v1169 = vrcp.pop %v1105
      %v1170 = vrcp.pop %v1106
      %v1171 = vrcp.pop %v1107
      %v1172 = vrcp.pop %v1108
      %v1173 = vrcp.pop %v1109
      %v1174 = vrcp.pop %v1110
      %v1175 = vrcp.pop %v1111
      %v1176 = vrcp.pop %v1112
      %v1177 = vrcp.pop %v1113
      %v1178 = vrcp.pop %v1114
      %v1179 = vrcp.pop %v1115
      %v1180 = vrcp.pop %v1116
      %v1181 = vrcp.pop %v1117
      %v1182 = vrcp.pop %v1118
      %v1183 = vrcp.pop %v1119
      %v1184 = vrcp.pop %v1120
      %v1185 = vrcp.pop %v1121
      %v1186 = vrcp.pop %v1122
      %v1187 = vrcp.pop %v1123
      %v1188 = vrcp.pop %v1124
      %v1189 = vrcp.pop %v1125
      %v1190 = vrcp.pop %v1126
      %v1191 = vrcp.pop %v1127
      %v1192 = vrcp.pop %v1128
      %v1193 = vrcp.pop %v1129
      %v1194 = vrcp.pop %v1130
      %v1195 = vrcp.pop %v1131
      %v1196 = vrcp.pop %v1132
      %v1197 = vrcp.pop %v1133
      %v1198 = vrcp.pop %v1134
      %v1199 = vrcp.pop %v1135
      %v1200 = vrcp.pop %v1136
      %v1201 = vrcp.pop %v1137
      %v1202 = vrcp.pop %v1138
      %v1203 = vrcp.pop %v1139
      %v1204 = vrcp.pop %v1140
      %v1205 = vrcp.pop %v1141
      %1270 = vrot.lane.b32.xlu0 %v1142, 64
      %v1271 = vpop.permute.xlu0 %1270
      %1272 = vrot.lane.b32.xlu0 %v1143, 64
      %v1273 = vpop.permute.xlu0 %1272
      %1274 = vrot.lane.b32.xlu0 %v1144, 64
      %v1275 = vpop.permute.xlu0 %1274
      %1276 = vrot.lane.b32.xlu0 %v1145, 64
      %v1277 = vpop.permute.xlu0 %1276
      %1278 = vrot.lane.b32.xlu0 %v1146, 64
      %v1279 = vpop.permute.xlu0 %1278
      %1280 = vrot.lane.b32.xlu0 %v1147, 64
      %v1281 = vpop.permute.xlu0 %1280
      %1282 = vrot.lane.b32.xlu0 %v1148, 64
      %v1283 = vpop.permute.xlu0 %1282
      %1284 = vrot.lane.b32.xlu0 %v1149, 64
      %v1285 = vpop.permute.xlu0 %1284
      %1286 = vrot.lane.b32.xlu0 %v1150, 64
      %v1287 = vpop.permute.xlu0 %1286
      %1288 = vrot.lane.b32.xlu0 %v1151, 64
      %v1289 = vpop.permute.xlu0 %1288
      %1290 = vrot.lane.b32.xlu0 %v1152, 64
      %v1291 = vpop.permute.xlu0 %1290
      %1292 = vrot.lane.b32.xlu0 %v1153, 64
      %v1293 = vpop.permute.xlu0 %1292
      %1294 = vrot.lane.b32.xlu0 %v1154, 64
      %v1295 = vpop.permute.xlu0 %1294
      %1296 = vrot.lane.b32.xlu0 %v1155, 64
      %v1297 = vpop.permute.xlu0 %1296
      %1298 = vrot.lane.b32.xlu0 %v1156, 64
      %v1299 = vpop.permute.xlu0 %1298
      %1300 = vrot.lane.b32.xlu0 %v1157, 64
      %v1301 = vpop.permute.xlu0 %1300
      %1302 = vrot.lane.b32.xlu0 %v1158, 64
      %v1303 = vpop.permute.xlu0 %1302
      %1304 = vrot.lane.b32.xlu0 %v1159, 64
      %v1305 = vpop.permute.xlu0 %1304
      %1306 = vrot.lane.b32.xlu0 %v1160, 64
      %v1307 = vpop.permute.xlu0 %1306
      %1308 = vrot.lane.b32.xlu0 %v1161, 64
      %v1309 = vpop.permute.xlu0 %1308
      %1310 = vrot.lane.b32.xlu0 %v1162, 64
      %v1311 = vpop.permute.xlu0 %1310
      %1312 = vrot.lane.b32.xlu0 %v1163, 64
      %v1313 = vpop.permute.xlu0 %1312
      %1314 = vrot.lane.b32.xlu0 %v1164, 64
      %v1315 = vpop.permute.xlu0 %1314
      %1316 = vrot.lane.b32.xlu0 %v1165, 64
      %v1317 = vpop.permute.xlu0 %1316
      %1318 = vrot.lane.b32.xlu0 %v1166, 64
      %v1319 = vpop.permute.xlu0 %1318
      %1320 = vrot.lane.b32.xlu0 %v1167, 64
      %v1321 = vpop.permute.xlu0 %1320
      %1322 = vrot.lane.b32.xlu0 %v1168, 64
      %v1323 = vpop.permute.xlu0 %1322
      %1324 = vrot.lane.b32.xlu0 %v1169, 64
      %v1325 = vpop.permute.xlu0 %1324
      %1326 = vrot.lane.b32.xlu0 %v1170, 64
      %v1327 = vpop.permute.xlu0 %1326
      %1328 = vrot.lane.b32.xlu0 %v1171, 64
      %v1329 = vpop.permute.xlu0 %1328
      %1330 = vrot.lane.b32.xlu0 %v1172, 64
      %v1331 = vpop.permute.xlu0 %1330
      %1332 = vrot.lane.b32.xlu0 %v1173, 64
      %v1333 = vpop.permute.xlu0 %1332
      %1334 = vrot.lane.b32.xlu0 %v1174, 64
      %v1335 = vpop.permute.xlu0 %1334
      %1336 = vrot.lane.b32.xlu0 %v1175, 64
      %v1337 = vpop.permute.xlu0 %1336
      %1338 = vrot.lane.b32.xlu0 %v1176, 64
      %v1339 = vpop.permute.xlu0 %1338
      %1340 = vrot.lane.b32.xlu0 %v1177, 64
      %v1341 = vpop.permute.xlu0 %1340
      %1342 = vrot.lane.b32.xlu0 %v1178, 64
      %v1343 = vpop.permute.xlu0 %1342
      %1344 = vrot.lane.b32.xlu0 %v1179, 64
      %v1345 = vpop.permute.xlu0 %1344
      %1346 = vrot.lane.b32.xlu0 %v1180, 64
      %v1347 = vpop.permute.xlu0 %1346
      %1348 = vrot.lane.b32.xlu0 %v1181, 64
      %v1349 = vpop.permute.xlu0 %1348
      %1350 = vrot.lane.b32.xlu0 %v1182, 64
      %v1351 = vpop.permute.xlu0 %1350
      %1352 = vrot.lane.b32.xlu0 %v1183, 64
      %v1353 = vpop.permute.xlu0 %1352
      %1354 = vrot.lane.b32.xlu0 %v1184, 64
      %v1355 = vpop.permute.xlu0 %1354
      %1356 = vrot.lane.b32.xlu0 %v1185, 64
      %v1357 = vpop.permute.xlu0 %1356
      %1358 = vrot.lane.b32.xlu0 %v1186, 64
      %v1359 = vpop.permute.xlu0 %1358
      %1360 = vrot.lane.b32.xlu0 %v1187, 64
      %v1361 = vpop.permute.xlu0 %1360
      %1362 = vrot.lane.b32.xlu0 %v1188, 64
      %v1363 = vpop.permute.xlu0 %1362
      %1364 = vrot.lane.b32.xlu0 %v1189, 64
      %v1365 = vpop.permute.xlu0 %1364
      %1366 = vrot.lane.b32.xlu0 %v1190, 64
      %v1367 = vpop.permute.xlu0 %1366
      %1368 = vrot.lane.b32.xlu0 %v1191, 64
      %v1369 = vpop.permute.xlu0 %1368
      %1370 = vrot.lane.b32.xlu0 %v1192, 64
      %v1371 = vpop.permute.xlu0 %1370
      %1372 = vrot.lane.b32.xlu0 %v1193, 64
      %v1373 = vpop.permute.xlu0 %1372
      %1374 = vrot.lane.b32.xlu0 %v1194, 64
      %v1375 = vpop.permute.xlu0 %1374
      %1376 = vrot.lane.b32.xlu0 %v1195, 64
      %v1377 = vpop.permute.xlu0 %1376
      %1378 = vrot.lane.b32.xlu0 %v1196, 64
      %v1379 = vpop.permute.xlu0 %1378
      %1380 = vrot.lane.b32.xlu0 %v1197, 64
      %v1381 = vpop.permute.xlu0 %1380
      %1382 = vrot.lane.b32.xlu0 %v1198, 64
      %v1383 = vpop.permute.xlu0 %1382
      %1384 = vrot.lane.b32.xlu0 %v1199, 64
      %v1385 = vpop.permute.xlu0 %1384
      %1386 = vrot.lane.b32.xlu0 %v1200, 64
      %v1387 = vpop.permute.xlu0 %1386
      %1388 = vrot.lane.b32.xlu0 %v1201, 64
      %v1389 = vpop.permute.xlu0 %1388
      %1390 = vrot.lane.b32.xlu0 %v1202, 64
      %v1391 = vpop.permute.xlu0 %1390
      %1392 = vrot.lane.b32.xlu0 %v1203, 64
      %v1393 = vpop.permute.xlu0 %1392
      %1394 = vrot.lane.b32.xlu0 %v1204, 64
      %v1395 = vpop.permute.xlu0 %1394
      %1396 = vrot.lane.b32.xlu0 %v1205, 64
      %v1397 = vpop.permute.xlu0 %1396
      %v1462 = vmul.f32 %v503, %v1271
      %v1463 = vmul.f32 %v508, %v1273
      %v1464 = vmul.f32 %v513, %v1275
      %v1465 = vmul.f32 %v518, %v1277
      %v1466 = vmul.f32 %v523, %v1279
      %v1467 = vmul.f32 %v528, %v1281
      %v1468 = vmul.f32 %v533, %v1283
      %v1469 = vmul.f32 %v538, %v1285
      %v1470 = vmul.f32 %v543, %v1287
      %v1471 = vmul.f32 %v548, %v1289
      %v1472 = vmul.f32 %v553, %v1291
      %v1473 = vmul.f32 %v558, %v1293
      %v1474 = vmul.f32 %v563, %v1295
      %v1475 = vmul.f32 %v568, %v1297
      %v1476 = vmul.f32 %v573, %v1299
      %v1477 = vmul.f32 %v578, %v1301
      %v1478 = vmul.f32 %v583, %v1303
      %v1479 = vmul.f32 %v588, %v1305
      %v1480 = vmul.f32 %v593, %v1307
      %v1481 = vmul.f32 %v598, %v1309
      %v1482 = vmul.f32 %v603, %v1311
      %v1483 = vmul.f32 %v608, %v1313
      %v1484 = vmul.f32 %v613, %v1315
      %v1485 = vmul.f32 %v618, %v1317
      %v1486 = vmul.f32 %v623, %v1319
      %v1487 = vmul.f32 %v628, %v1321
      %v1488 = vmul.f32 %v633, %v1323
      %v1489 = vmul.f32 %v638, %v1325
      %v1490 = vmul.f32 %v643, %v1327
      %v1491 = vmul.f32 %v648, %v1329
      %v1492 = vmul.f32 %v653, %v1331
      %v1493 = vmul.f32 %v658, %v1333
      %v1494 = vmul.f32 %v663, %v1335
      %v1495 = vmul.f32 %v668, %v1337
      %v1496 = vmul.f32 %v673, %v1339
      %v1497 = vmul.f32 %v678, %v1341
      %v1498 = vmul.f32 %v683, %v1343
      %v1499 = vmul.f32 %v688, %v1345
      %v1500 = vmul.f32 %v693, %v1347
      %v1501 = vmul.f32 %v698, %v1349
      %v1502 = vmul.f32 %v703, %v1351
      %v1503 = vmul.f32 %v708, %v1353
      %v1504 = vmul.f32 %v713, %v1355
      %v1505 = vmul.f32 %v718, %v1357
      %v1506 = vmul.f32 %v723, %v1359
      %v1507 = vmul.f32 %v728, %v1361
      %v1508 = vmul.f32 %v733, %v1363
      %v1509 = vmul.f32 %v738, %v1365
      %v1510 = vmul.f32 %v743, %v1367
      %v1511 = vmul.f32 %v748, %v1369
      %v1512 = vmul.f32 %v753, %v1371
      %v1513 = vmul.f32 %v758, %v1373
      %v1514 = vmul.f32 %v763, %v1375
      %v1515 = vmul.f32 %v768, %v1377
      %v1516 = vmul.f32 %v773, %v1379
      %v1517 = vmul.f32 %v778, %v1381
      %v1518 = vmul.f32 %v783, %v1383
      %v1519 = vmul.f32 %v788, %v1385
      %v1520 = vmul.f32 %v793, %v1387
      %v1521 = vmul.f32 %v798, %v1389
      %v1522 = vmul.f32 %v803, %v1391
      %v1523 = vmul.f32 %v808, %v1393
      %v1524 = vmul.f32 %v813, %v1395
      %v1525 = vmul.f32 %v818, %v1397
      %v1527 = vlaneseq
      %v1528 = vshrl.u32 %v1527, 7
      %v1529 = vsub.s32 0, %v1528
      %v1530 = vrot.slane %v821, %v1529
      %1531 = vrot.lane.b32.xlu0 %v1530, 64
      %v1532 = vpop.permute.xlu0 %1531
      %v1534 = vadd.f32 %v1462, %v1532
      %v1535 = vadd.f32 %v1463, %v1532
      %v1536 = vadd.f32 %v1464, %v1532
      %v1537 = vadd.f32 %v1465, %v1532
      %v1538 = vadd.f32 %v1466, %v1532
      %v1539 = vadd.f32 %v1467, %v1532
      %v1540 = vadd.f32 %v1468, %v1532
      %v1541 = vadd.f32 %v1469, %v1532
      %v1542 = vadd.f32 %v1470, %v1532
      %v1543 = vadd.f32 %v1471, %v1532
      %v1544 = vadd.f32 %v1472, %v1532
      %v1545 = vadd.f32 %v1473, %v1532
      %v1546 = vadd.f32 %v1474, %v1532
      %v1547 = vadd.f32 %v1475, %v1532
      %v1548 = vadd.f32 %v1476, %v1532
      %v1549 = vadd.f32 %v1477, %v1532
      %v1550 = vadd.f32 %v1478, %v1532
      %v1551 = vadd.f32 %v1479, %v1532
      %v1552 = vadd.f32 %v1480, %v1532
      %v1553 = vadd.f32 %v1481, %v1532
      %v1554 = vadd.f32 %v1482, %v1532
      %v1555 = vadd.f32 %v1483, %v1532
      %v1556 = vadd.f32 %v1484, %v1532
      %v1557 = vadd.f32 %v1485, %v1532
      %v1558 = vadd.f32 %v1486, %v1532
      %v1559 = vadd.f32 %v1487, %v1532
      %v1560 = vadd.f32 %v1488, %v1532
      %v1561 = vadd.f32 %v1489, %v1532
      %v1562 = vadd.f32 %v1490, %v1532
      %v1563 = vadd.f32 %v1491, %v1532
      %v1564 = vadd.f32 %v1492, %v1532
      %v1565 = vadd.f32 %v1493, %v1532
      %v1566 = vadd.f32 %v1494, %v1532
      %v1567 = vadd.f32 %v1495, %v1532
      %v1568 = vadd.f32 %v1496, %v1532
      %v1569 = vadd.f32 %v1497, %v1532
      %v1570 = vadd.f32 %v1498, %v1532
      %v1571 = vadd.f32 %v1499, %v1532
      %v1572 = vadd.f32 %v1500, %v1532
      %v1573 = vadd.f32 %v1501, %v1532
      %v1574 = vadd.f32 %v1502, %v1532
      %v1575 = vadd.f32 %v1503, %v1532
      %v1576 = vadd.f32 %v1504, %v1532
      %v1577 = vadd.f32 %v1505, %v1532
      %v1578 = vadd.f32 %v1506, %v1532
      %v1579 = vadd.f32 %v1507, %v1532
      %v1580 = vadd.f32 %v1508, %v1532
      %v1581 = vadd.f32 %v1509, %v1532
      %v1582 = vadd.f32 %v1510, %v1532
      %v1583 = vadd.f32 %v1511, %v1532
      %v1584 = vadd.f32 %v1512, %v1532
      %v1585 = vadd.f32 %v1513, %v1532
      %v1586 = vadd.f32 %v1514, %v1532
      %v1587 = vadd.f32 %v1515, %v1532
      %v1588 = vadd.f32 %v1516, %v1532
      %v1589 = vadd.f32 %v1517, %v1532
      %v1590 = vadd.f32 %v1518, %v1532
      %v1591 = vadd.f32 %v1519, %v1532
      %v1592 = vadd.f32 %v1520, %v1532
      %v1593 = vadd.f32 %v1521, %v1532
      %v1594 = vadd.f32 %v1522, %v1532
      %v1595 = vadd.f32 %v1523, %v1532
      %v1596 = vadd.f32 %v1524, %v1532
      %v1597 = vadd.f32 %v1525, %v1532
      %v1598 = vmax.f32 %v1534, 0.0
      %v1599 = vmax.f32 %v1535, 0.0
      %v1600 = vmax.f32 %v1536, 0.0
      %v1601 = vmax.f32 %v1537, 0.0
      %v1602 = vmax.f32 %v1538, 0.0
      %v1603 = vmax.f32 %v1539, 0.0
      %v1604 = vmax.f32 %v1540, 0.0
      %v1605 = vmax.f32 %v1541, 0.0
      %v1606 = vmax.f32 %v1542, 0.0
      %v1607 = vmax.f32 %v1543, 0.0
      %v1608 = vmax.f32 %v1544, 0.0
      %v1609 = vmax.f32 %v1545, 0.0
      %v1610 = vmax.f32 %v1546, 0.0
      %v1611 = vmax.f32 %v1547, 0.0
      %v1612 = vmax.f32 %v1548, 0.0
      %v1613 = vmax.f32 %v1549, 0.0
      %v1614 = vmax.f32 %v1550, 0.0
      %v1615 = vmax.f32 %v1551, 0.0
      %v1616 = vmax.f32 %v1552, 0.0
      %v1617 = vmax.f32 %v1553, 0.0
      %v1618 = vmax.f32 %v1554, 0.0
      %v1619 = vmax.f32 %v1555, 0.0
      %v1620 = vmax.f32 %v1556, 0.0
      %v1621 = vmax.f32 %v1557, 0.0
      %v1622 = vmax.f32 %v1558, 0.0
      %v1623 = vmax.f32 %v1559, 0.0
      %v1624 = vmax.f32 %v1560, 0.0
      %v1625 = vmax.f32 %v1561, 0.0
      %v1626 = vmax.f32 %v1562, 0.0
      %v1627 = vmax.f32 %v1563, 0.0
      %v1628 = vmax.f32 %v1564, 0.0
      %v1629 = vmax.f32 %v1565, 0.0
      %v1630 = vmax.f32 %v1566, 0.0
      %v1631 = vmax.f32 %v1567, 0.0
      %v1632 = vmax.f32 %v1568, 0.0
      %v1633 = vmax.f32 %v1569, 0.0
      %v1634 = vmax.f32 %v1570, 0.0
      %v1635 = vmax.f32 %v1571, 0.0
      %v1636 = vmax.f32 %v1572, 0.0
      %v1637 = vmax.f32 %v1573, 0.0
      %v1638 = vmax.f32 %v1574, 0.0
      %v1639 = vmax.f32 %v1575, 0.0
      %v1640 = vmax.f32 %v1576, 0.0
      %v1641 = vmax.f32 %v1577, 0.0
      %v1642 = vmax.f32 %v1578, 0.0
      %v1643 = vmax.f32 %v1579, 0.0
      %v1644 = vmax.f32 %v1580, 0.0
      %v1645 = vmax.f32 %v1581, 0.0
      %v1646 = vmax.f32 %v1582, 0.0
      %v1647 = vmax.f32 %v1583, 0.0
      %v1648 = vmax.f32 %v1584, 0.0
      %v1649 = vmax.f32 %v1585, 0.0
      %v1650 = vmax.f32 %v1586, 0.0
      %v1651 = vmax.f32 %v1587, 0.0
      %v1652 = vmax.f32 %v1588, 0.0
      %v1653 = vmax.f32 %v1589, 0.0
      %v1654 = vmax.f32 %v1590, 0.0
      %v1655 = vmax.f32 %v1591, 0.0
      %v1656 = vmax.f32 %v1592, 0.0
      %v1657 = vmax.f32 %v1593, 0.0
      %v1658 = vmax.f32 %v1594, 0.0
      %v1659 = vmax.f32 %v1595, 0.0
      %v1660 = vmax.f32 %v1596, 0.0
      %v1661 = vmax.f32 %v1597, 0.0
      %vm1662 = vcmask 1048064
      %v1663 = vsel %vm1662, %v1598, 0.0
      %v1664 = vsel %vm1662, %v1599, 0.0
      %v1665 = vadd.f32 %v1663, %v1664
      %v1666 = vsel %vm1662, %v1600, 0.0
      %v1667 = vadd.f32 %v1665, %v1666
      %v1668 = vsel %vm1662, %v1601, 0.0
      %v1669 = vadd.f32 %v1667, %v1668
      %v1670 = vrot.slane %v1669, 4
      %v1671 = vadd.f32 %v1669, %v1670
      %v1672 = vrot.slane %v1671, 2
      %v1673 = vadd.f32 %v1671, %v1672
      %v1674 = vrot.slane %v1673, 1
      %v1675 = vadd.f32 %v1673, %v1674
      %v1676 = vsel %vm1662, %v1602, 0.0
      %v1677 = vsel %vm1662, %v1603, 0.0
      %v1678 = vadd.f32 %v1676, %v1677
      %v1679 = vsel %vm1662, %v1604, 0.0
      %v1680 = vadd.f32 %v1678, %v1679
      %v1681 = vsel %vm1662, %v1605, 0.0
      %v1682 = vadd.f32 %v1680, %v1681
      %v1683 = vrot.slane %v1682, 4
      %v1684 = vadd.f32 %v1682, %v1683
      %v1685 = vrot.slane %v1684, 2
      %v1686 = vadd.f32 %v1684, %v1685
      %v1687 = vrot.slane %v1686, 1
      %v1688 = vadd.f32 %v1686, %v1687
      %v1689 = vsel %vm1662, %v1606, 0.0
      %v1690 = vsel %vm1662, %v1607, 0.0
      %v1691 = vadd.f32 %v1689, %v1690
      %v1692 = vsel %vm1662, %v1608, 0.0
      %v1693 = vadd.f32 %v1691, %v1692
      %v1694 = vsel %vm1662, %v1609, 0.0
      %v1695 = vadd.f32 %v1693, %v1694
      %v1696 = vrot.slane %v1695, 4
      %v1697 = vadd.f32 %v1695, %v1696
      %v1698 = vrot.slane %v1697, 2
      %v1699 = vadd.f32 %v1697, %v1698
      %v1700 = vrot.slane %v1699, 1
      %v1701 = vadd.f32 %v1699, %v1700
      %v1702 = vsel %vm1662, %v1610, 0.0
      %v1703 = vsel %vm1662, %v1611, 0.0
      %v1704 = vadd.f32 %v1702, %v1703
      %v1705 = vsel %vm1662, %v1612, 0.0
      %v1706 = vadd.f32 %v1704, %v1705
      %v1707 = vsel %vm1662, %v1613, 0.0
      %v1708 = vadd.f32 %v1706, %v1707
      %v1709 = vrot.slane %v1708, 4
      %v1710 = vadd.f32 %v1708, %v1709
      %v1711 = vrot.slane %v1710, 2
      %v1712 = vadd.f32 %v1710, %v1711
      %v1713 = vrot.slane %v1712, 1
      %v1714 = vadd.f32 %v1712, %v1713
      %v1715 = vsel %vm1662, %v1614, 0.0
      %v1716 = vsel %vm1662, %v1615, 0.0
      %v1717 = vadd.f32 %v1715, %v1716
      %v1718 = vsel %vm1662, %v1616, 0.0
      %v1719 = vadd.f32 %v1717, %v1718
      %v1720 = vsel %vm1662, %v1617, 0.0
      %v1721 = vadd.f32 %v1719, %v1720
      %v1722 = vrot.slane %v1721, 4
      %v1723 = vadd.f32 %v1721, %v1722
      %v1724 = vrot.slane %v1723, 2
      %v1725 = vadd.f32 %v1723, %v1724
      %v1726 = vrot.slane %v1725, 1
      %v1727 = vadd.f32 %v1725, %v1726
      %v1728 = vsel %vm1662, %v1618, 0.0
      %v1729 = vsel %vm1662, %v1619, 0.0
      %v1730 = vadd.f32 %v1728, %v1729
      %v1731 = vsel %vm1662, %v1620, 0.0
      %v1732 = vadd.f32 %v1730, %v1731
      %v1733 = vsel %vm1662, %v1621, 0.0
      %v1734 = vadd.f32 %v1732, %v1733
      %v1735 = vrot.slane %v1734, 4
      %v1736 = vadd.f32 %v1734, %v1735
      %v1737 = vrot.slane %v1736, 2
      %v1738 = vadd.f32 %v1736, %v1737
      %v1739 = vrot.slane %v1738, 1
      %v1740 = vadd.f32 %v1738, %v1739
      %v1741 = vsel %vm1662, %v1622, 0.0
      %v1742 = vsel %vm1662, %v1623, 0.0
      %v1743 = vadd.f32 %v1741, %v1742
      %v1744 = vsel %vm1662, %v1624, 0.0
      %v1745 = vadd.f32 %v1743, %v1744
      %v1746 = vsel %vm1662, %v1625, 0.0
      %v1747 = vadd.f32 %v1745, %v1746
      %v1748 = vrot.slane %v1747, 4
      %v1749 = vadd.f32 %v1747, %v1748
      %v1750 = vrot.slane %v1749, 2
      %v1751 = vadd.f32 %v1749, %v1750
      %v1752 = vrot.slane %v1751, 1
      %v1753 = vadd.f32 %v1751, %v1752
      %v1754 = vsel %vm1662, %v1626, 0.0
      %v1755 = vsel %vm1662, %v1627, 0.0
      %v1756 = vadd.f32 %v1754, %v1755
      %v1757 = vsel %vm1662, %v1628, 0.0
      %v1758 = vadd.f32 %v1756, %v1757
      %v1759 = vsel %vm1662, %v1629, 0.0
      %v1760 = vadd.f32 %v1758, %v1759
      %v1761 = vrot.slane %v1760, 4
      %v1762 = vadd.f32 %v1760, %v1761
      %v1763 = vrot.slane %v1762, 2
      %v1764 = vadd.f32 %v1762, %v1763
      %v1765 = vrot.slane %v1764, 1
      %v1766 = vadd.f32 %v1764, %v1765
      %v1767 = vsel %vm1662, %v1630, 0.0
      %v1768 = vsel %vm1662, %v1631, 0.0
      %v1769 = vadd.f32 %v1767, %v1768
      %v1770 = vsel %vm1662, %v1632, 0.0
      %v1771 = vadd.f32 %v1769, %v1770
      %v1772 = vsel %vm1662, %v1633, 0.0
      %v1773 = vadd.f32 %v1771, %v1772
      %v1774 = vrot.slane %v1773, 4
      %v1775 = vadd.f32 %v1773, %v1774
      %v1776 = vrot.slane %v1775, 2
      %v1777 = vadd.f32 %v1775, %v1776
      %v1778 = vrot.slane %v1777, 1
      %v1779 = vadd.f32 %v1777, %v1778
      %v1780 = vsel %vm1662, %v1634, 0.0
      %v1781 = vsel %vm1662, %v1635, 0.0
      %v1782 = vadd.f32 %v1780, %v1781
      %v1783 = vsel %vm1662, %v1636, 0.0
      %v1784 = vadd.f32 %v1782, %v1783
      %v1785 = vsel %vm1662, %v1637, 0.0
      %v1786 = vadd.f32 %v1784, %v1785
      %v1787 = vrot.slane %v1786, 4
      %v1788 = vadd.f32 %v1786, %v1787
      %v1789 = vrot.slane %v1788, 2
      %v1790 = vadd.f32 %v1788, %v1789
      %v1791 = vrot.slane %v1790, 1
      %v1792 = vadd.f32 %v1790, %v1791
      %v1793 = vsel %vm1662, %v1638, 0.0
      %v1794 = vsel %vm1662, %v1639, 0.0
      %v1795 = vadd.f32 %v1793, %v1794
      %v1796 = vsel %vm1662, %v1640, 0.0
      %v1797 = vadd.f32 %v1795, %v1796
      %v1798 = vsel %vm1662, %v1641, 0.0
      %v1799 = vadd.f32 %v1797, %v1798
      %v1800 = vrot.slane %v1799, 4
      %v1801 = vadd.f32 %v1799, %v1800
      %v1802 = vrot.slane %v1801, 2
      %v1803 = vadd.f32 %v1801, %v1802
      %v1804 = vrot.slane %v1803, 1
      %v1805 = vadd.f32 %v1803, %v1804
      %v1806 = vsel %vm1662, %v1642, 0.0
      %v1807 = vsel %vm1662, %v1643, 0.0
      %v1808 = vadd.f32 %v1806, %v1807
      %v1809 = vsel %vm1662, %v1644, 0.0
      %v1810 = vadd.f32 %v1808, %v1809
      %v1811 = vsel %vm1662, %v1645, 0.0
      %v1812 = vadd.f32 %v1810, %v1811
      %v1813 = vrot.slane %v1812, 4
      %v1814 = vadd.f32 %v1812, %v1813
      %v1815 = vrot.slane %v1814, 2
      %v1816 = vadd.f32 %v1814, %v1815
      %v1817 = vrot.slane %v1816, 1
      %v1818 = vadd.f32 %v1816, %v1817
      %v1819 = vsel %vm1662, %v1646, 0.0
      %v1820 = vsel %vm1662, %v1647, 0.0
      %v1821 = vadd.f32 %v1819, %v1820
      %v1822 = vsel %vm1662, %v1648, 0.0
      %v1823 = vadd.f32 %v1821, %v1822
      %v1824 = vsel %vm1662, %v1649, 0.0
      %v1825 = vadd.f32 %v1823, %v1824
      %v1826 = vrot.slane %v1825, 4
      %v1827 = vadd.f32 %v1825, %v1826
      %v1828 = vrot.slane %v1827, 2
      %v1829 = vadd.f32 %v1827, %v1828
      %v1830 = vrot.slane %v1829, 1
      %v1831 = vadd.f32 %v1829, %v1830
      %v1832 = vsel %vm1662, %v1650, 0.0
      %v1833 = vsel %vm1662, %v1651, 0.0
      %v1834 = vadd.f32 %v1832, %v1833
      %v1835 = vsel %vm1662, %v1652, 0.0
      %v1836 = vadd.f32 %v1834, %v1835
      %v1837 = vsel %vm1662, %v1653, 0.0
      %v1838 = vadd.f32 %v1836, %v1837
      %v1839 = vrot.slane %v1838, 4
      %v1840 = vadd.f32 %v1838, %v1839
      %v1841 = vrot.slane %v1840, 2
      %v1842 = vadd.f32 %v1840, %v1841
      %v1843 = vrot.slane %v1842, 1
      %v1844 = vadd.f32 %v1842, %v1843
      %v1845 = vsel %vm1662, %v1654, 0.0
      %v1846 = vsel %vm1662, %v1655, 0.0
      %v1847 = vadd.f32 %v1845, %v1846
      %v1848 = vsel %vm1662, %v1656, 0.0
      %v1849 = vadd.f32 %v1847, %v1848
      %v1850 = vsel %vm1662, %v1657, 0.0
      %v1851 = vadd.f32 %v1849, %v1850
      %v1852 = vrot.slane %v1851, 4
      %v1853 = vadd.f32 %v1851, %v1852
      %v1854 = vrot.slane %v1853, 2
      %v1855 = vadd.f32 %v1853, %v1854
      %v1856 = vrot.slane %v1855, 1
      %v1857 = vadd.f32 %v1855, %v1856
      %v1858 = vsel %vm1662, %v1658, 0.0
      %v1859 = vsel %vm1662, %v1659, 0.0
      %v1860 = vadd.f32 %v1858, %v1859
      %v1861 = vsel %vm1662, %v1660, 0.0
      %v1862 = vadd.f32 %v1860, %v1861
      %v1863 = vsel %vm1662, %v1661, 0.0
      %v1864 = vadd.f32 %v1862, %v1863
      %v1865 = vrot.slane %v1864, 4
      %v1866 = vadd.f32 %v1864, %v1865
      %v1867 = vrot.slane %v1866, 2
      %v1868 = vadd.f32 %v1866, %v1867
      %v1869 = vrot.slane %v1868, 1
      %v1870 = vadd.f32 %v1868, %v1869
      %v1871 = vadd.f32 %v503, %v1532
      %v1872 = vadd.f32 %v508, %v1532
      %v1873 = vadd.f32 %v513, %v1532
      %v1874 = vadd.f32 %v518, %v1532
      %v1875 = vadd.f32 %v523, %v1532
      %v1876 = vadd.f32 %v528, %v1532
      %v1877 = vadd.f32 %v533, %v1532
      %v1878 = vadd.f32 %v538, %v1532
      %v1879 = vadd.f32 %v543, %v1532
      %v1880 = vadd.f32 %v548, %v1532
      %v1881 = vadd.f32 %v553, %v1532
      %v1882 = vadd.f32 %v558, %v1532
      %v1883 = vadd.f32 %v563, %v1532
      %v1884 = vadd.f32 %v568, %v1532
      %v1885 = vadd.f32 %v573, %v1532
      %v1886 = vadd.f32 %v578, %v1532
      %v1887 = vadd.f32 %v583, %v1532
      %v1888 = vadd.f32 %v588, %v1532
      %v1889 = vadd.f32 %v593, %v1532
      %v1890 = vadd.f32 %v598, %v1532
      %v1891 = vadd.f32 %v603, %v1532
      %v1892 = vadd.f32 %v608, %v1532
      %v1893 = vadd.f32 %v613, %v1532
      %v1894 = vadd.f32 %v618, %v1532
      %v1895 = vadd.f32 %v623, %v1532
      %v1896 = vadd.f32 %v628, %v1532
      %v1897 = vadd.f32 %v633, %v1532
      %v1898 = vadd.f32 %v638, %v1532
      %v1899 = vadd.f32 %v643, %v1532
      %v1900 = vadd.f32 %v648, %v1532
      %v1901 = vadd.f32 %v653, %v1532
      %v1902 = vadd.f32 %v658, %v1532
      %v1903 = vadd.f32 %v663, %v1532
      %v1904 = vadd.f32 %v668, %v1532
      %v1905 = vadd.f32 %v673, %v1532
      %v1906 = vadd.f32 %v678, %v1532
      %v1907 = vadd.f32 %v683, %v1532
      %v1908 = vadd.f32 %v688, %v1532
      %v1909 = vadd.f32 %v693, %v1532
      %v1910 = vadd.f32 %v698, %v1532
      %v1911 = vadd.f32 %v703, %v1532
      %v1912 = vadd.f32 %v708, %v1532
      %v1913 = vadd.f32 %v713, %v1532
      %v1914 = vadd.f32 %v718, %v1532
      %v1915 = vadd.f32 %v723, %v1532
      %v1916 = vadd.f32 %v728, %v1532
      %v1917 = vadd.f32 %v733, %v1532
      %v1918 = vadd.f32 %v738, %v1532
      %v1919 = vadd.f32 %v743, %v1532
      %v1920 = vadd.f32 %v748, %v1532
      %v1921 = vadd.f32 %v753, %v1532
      %v1922 = vadd.f32 %v758, %v1532
      %v1923 = vadd.f32 %v763, %v1532
      %v1924 = vadd.f32 %v768, %v1532
      %v1925 = vadd.f32 %v773, %v1532
      %v1926 = vadd.f32 %v778, %v1532
      %v1927 = vadd.f32 %v783, %v1532
      %v1928 = vadd.f32 %v788, %v1532
      %v1929 = vadd.f32 %v793, %v1532
      %v1930 = vadd.f32 %v798, %v1532
      %v1931 = vadd.f32 %v803, %v1532
      %v1932 = vadd.f32 %v808, %v1532
      %v1933 = vadd.f32 %v813, %v1532
      %v1934 = vadd.f32 %v818, %v1532
      %v1935 = vmax.f32 %v1871, 0.0
      %v1936 = vmax.f32 %v1872, 0.0
      %v1937 = vmax.f32 %v1873, 0.0
      %v1938 = vmax.f32 %v1874, 0.0
      %v1939 = vmax.f32 %v1875, 0.0
      %v1940 = vmax.f32 %v1876, 0.0
      %v1941 = vmax.f32 %v1877, 0.0
      %v1942 = vmax.f32 %v1878, 0.0
      %v1943 = vmax.f32 %v1879, 0.0
      %v1944 = vmax.f32 %v1880, 0.0
      %v1945 = vmax.f32 %v1881, 0.0
      %v1946 = vmax.f32 %v1882, 0.0
      %v1947 = vmax.f32 %v1883, 0.0
      %v1948 = vmax.f32 %v1884, 0.0
      %v1949 = vmax.f32 %v1885, 0.0
      %v1950 = vmax.f32 %v1886, 0.0
      %v1951 = vmax.f32 %v1887, 0.0
      %v1952 = vmax.f32 %v1888, 0.0
      %v1953 = vmax.f32 %v1889, 0.0
      %v1954 = vmax.f32 %v1890, 0.0
      %v1955 = vmax.f32 %v1891, 0.0
      %v1956 = vmax.f32 %v1892, 0.0
      %v1957 = vmax.f32 %v1893, 0.0
      %v1958 = vmax.f32 %v1894, 0.0
      %v1959 = vmax.f32 %v1895, 0.0
      %v1960 = vmax.f32 %v1896, 0.0
      %v1961 = vmax.f32 %v1897, 0.0
      %v1962 = vmax.f32 %v1898, 0.0
      %v1963 = vmax.f32 %v1899, 0.0
      %v1964 = vmax.f32 %v1900, 0.0
      %v1965 = vmax.f32 %v1901, 0.0
      %v1966 = vmax.f32 %v1902, 0.0
      %v1967 = vmax.f32 %v1903, 0.0
      %v1968 = vmax.f32 %v1904, 0.0
      %v1969 = vmax.f32 %v1905, 0.0
      %v1970 = vmax.f32 %v1906, 0.0
      %v1971 = vmax.f32 %v1907, 0.0
      %v1972 = vmax.f32 %v1908, 0.0
      %v1973 = vmax.f32 %v1909, 0.0
      %v1974 = vmax.f32 %v1910, 0.0
      %v1975 = vmax.f32 %v1911, 0.0
      %v1976 = vmax.f32 %v1912, 0.0
      %v1977 = vmax.f32 %v1913, 0.0
      %v1978 = vmax.f32 %v1914, 0.0
      %v1979 = vmax.f32 %v1915, 0.0
      %v1980 = vmax.f32 %v1916, 0.0
      %v1981 = vmax.f32 %v1917, 0.0
      %v1982 = vmax.f32 %v1918, 0.0
      %v1983 = vmax.f32 %v1919, 0.0
      %v1984 = vmax.f32 %v1920, 0.0
      %v1985 = vmax.f32 %v1921, 0.0
      %v1986 = vmax.f32 %v1922, 0.0
      %v1987 = vmax.f32 %v1923, 0.0
      %v1988 = vmax.f32 %v1924, 0.0
      %v1989 = vmax.f32 %v1925, 0.0
      %v1990 = vmax.f32 %v1926, 0.0
      %v1991 = vmax.f32 %v1927, 0.0
      %v1992 = vmax.f32 %v1928, 0.0
      %v1993 = vmax.f32 %v1929, 0.0
      %v1994 = vmax.f32 %v1930, 0.0
      %v1995 = vmax.f32 %v1931, 0.0
      %v1996 = vmax.f32 %v1932, 0.0
      %v1997 = vmax.f32 %v1933, 0.0
      %v1998 = vmax.f32 %v1934, 0.0
      %vm1999 = vcmask 785920
      %v2000 = vsel %vm1999, %v1935, -inf
      %v2001 = vsel %vm1999, %v1936, -inf
      %v2002 = vmax.f32 %v2000, %v2001
      %v2003 = vsel %vm1999, %v1937, -inf
      %v2004 = vmax.f32 %v2002, %v2003
      %v2005 = vsel %vm1999, %v1938, -inf
      %v2006 = vmax.f32 %v2004, %v2005
      %v2007 = vrot.slane %v2006, 4
      %v2008 = vmax.f32 %v2006, %v2007
      %v2009 = vrot.slane %v2008, 2
      %v2010 = vmax.f32 %v2008, %v2009
      %v2011 = vrot.slane %v2010, 1
      %v2012 = vmax.f32 %v2010, %v2011
      %v2013 = vsel %vm1999, %v1939, -inf
      %v2014 = vsel %vm1999, %v1940, -inf
      %v2015 = vmax.f32 %v2013, %v2014
      %v2016 = vsel %vm1999, %v1941, -inf
      %v2017 = vmax.f32 %v2015, %v2016
      %v2018 = vsel %vm1999, %v1942, -inf
      %v2019 = vmax.f32 %v2017, %v2018
      %v2020 = vrot.slane %v2019, 4
      %v2021 = vmax.f32 %v2019, %v2020
      %v2022 = vrot.slane %v2021, 2
      %v2023 = vmax.f32 %v2021, %v2022
      %v2024 = vrot.slane %v2023, 1
      %v2025 = vmax.f32 %v2023, %v2024
      %v2026 = vsel %vm1999, %v1943, -inf
      %v2027 = vsel %vm1999, %v1944, -inf
      %v2028 = vmax.f32 %v2026, %v2027
      %v2029 = vsel %vm1999, %v1945, -inf
      %v2030 = vmax.f32 %v2028, %v2029
      %v2031 = vsel %vm1999, %v1946, -inf
      %v2032 = vmax.f32 %v2030, %v2031
      %v2033 = vrot.slane %v2032, 4
      %v2034 = vmax.f32 %v2032, %v2033
      %v2035 = vrot.slane %v2034, 2
      %v2036 = vmax.f32 %v2034, %v2035
      %v2037 = vrot.slane %v2036, 1
      %v2038 = vmax.f32 %v2036, %v2037
      %v2039 = vsel %vm1999, %v1947, -inf
      %v2040 = vsel %vm1999, %v1948, -inf
      %v2041 = vmax.f32 %v2039, %v2040
      %v2042 = vsel %vm1999, %v1949, -inf
      %v2043 = vmax.f32 %v2041, %v2042
      %v2044 = vsel %vm1999, %v1950, -inf
      %v2045 = vmax.f32 %v2043, %v2044
      %v2046 = vrot.slane %v2045, 4
      %v2047 = vmax.f32 %v2045, %v2046
      %v2048 = vrot.slane %v2047, 2
      %v2049 = vmax.f32 %v2047, %v2048
      %v2050 = vrot.slane %v2049, 1
      %v2051 = vmax.f32 %v2049, %v2050
      %v2052 = vsel %vm1999, %v1951, -inf
      %v2053 = vsel %vm1999, %v1952, -inf
      %v2054 = vmax.f32 %v2052, %v2053
      %v2055 = vsel %vm1999, %v1953, -inf
      %v2056 = vmax.f32 %v2054, %v2055
      %v2057 = vsel %vm1999, %v1954, -inf
      %v2058 = vmax.f32 %v2056, %v2057
      %v2059 = vrot.slane %v2058, 4
      %v2060 = vmax.f32 %v2058, %v2059
      %v2061 = vrot.slane %v2060, 2
      %v2062 = vmax.f32 %v2060, %v2061
      %v2063 = vrot.slane %v2062, 1
      %v2064 = vmax.f32 %v2062, %v2063
      %v2065 = vsel %vm1999, %v1955, -inf
      %v2066 = vsel %vm1999, %v1956, -inf
      %v2067 = vmax.f32 %v2065, %v2066
      %v2068 = vsel %vm1999, %v1957, -inf
      %v2069 = vmax.f32 %v2067, %v2068
      %v2070 = vsel %vm1999, %v1958, -inf
      %v2071 = vmax.f32 %v2069, %v2070
      %v2072 = vrot.slane %v2071, 4
      %v2073 = vmax.f32 %v2071, %v2072
      %v2074 = vrot.slane %v2073, 2
      %v2075 = vmax.f32 %v2073, %v2074
      %v2076 = vrot.slane %v2075, 1
      %v2077 = vmax.f32 %v2075, %v2076
      %v2078 = vsel %vm1999, %v1959, -inf
      %v2079 = vsel %vm1999, %v1960, -inf
      %v2080 = vmax.f32 %v2078, %v2079
      %v2081 = vsel %vm1999, %v1961, -inf
      %v2082 = vmax.f32 %v2080, %v2081
      %v2083 = vsel %vm1999, %v1962, -inf
      %v2084 = vmax.f32 %v2082, %v2083
      %v2085 = vrot.slane %v2084, 4
      %v2086 = vmax.f32 %v2084, %v2085
      %v2087 = vrot.slane %v2086, 2
      %v2088 = vmax.f32 %v2086, %v2087
      %v2089 = vrot.slane %v2088, 1
      %v2090 = vmax.f32 %v2088, %v2089
      %v2091 = vsel %vm1999, %v1963, -inf
      %v2092 = vsel %vm1999, %v1964, -inf
      %v2093 = vmax.f32 %v2091, %v2092
      %v2094 = vsel %vm1999, %v1965, -inf
      %v2095 = vmax.f32 %v2093, %v2094
      %v2096 = vsel %vm1999, %v1966, -inf
      %v2097 = vmax.f32 %v2095, %v2096
      %v2098 = vrot.slane %v2097, 4
      %v2099 = vmax.f32 %v2097, %v2098
      %v2100 = vrot.slane %v2099, 2
      %v2101 = vmax.f32 %v2099, %v2100
      %v2102 = vrot.slane %v2101, 1
      %v2103 = vmax.f32 %v2101, %v2102
      %v2104 = vsel %vm1999, %v1967, -inf
      %v2105 = vsel %vm1999, %v1968, -inf
      %v2106 = vmax.f32 %v2104, %v2105
      %v2107 = vsel %vm1999, %v1969, -inf
      %v2108 = vmax.f32 %v2106, %v2107
      %v2109 = vsel %vm1999, %v1970, -inf
      %v2110 = vmax.f32 %v2108, %v2109
      %v2111 = vrot.slane %v2110, 4
      %v2112 = vmax.f32 %v2110, %v2111
      %v2113 = vrot.slane %v2112, 2
      %v2114 = vmax.f32 %v2112, %v2113
      %v2115 = vrot.slane %v2114, 1
      %v2116 = vmax.f32 %v2114, %v2115
      %v2117 = vsel %vm1999, %v1971, -inf
      %v2118 = vsel %vm1999, %v1972, -inf
      %v2119 = vmax.f32 %v2117, %v2118
      %v2120 = vsel %vm1999, %v1973, -inf
      %v2121 = vmax.f32 %v2119, %v2120
      %v2122 = vsel %vm1999, %v1974, -inf
      %v2123 = vmax.f32 %v2121, %v2122
      %v2124 = vrot.slane %v2123, 4
      %v2125 = vmax.f32 %v2123, %v2124
      %v2126 = vrot.slane %v2125, 2
      %v2127 = vmax.f32 %v2125, %v2126
      %v2128 = vrot.slane %v2127, 1
      %v2129 = vmax.f32 %v2127, %v2128
      %v2130 = vsel %vm1999, %v1975, -inf
      %v2131 = vsel %vm1999, %v1976, -inf
      %v2132 = vmax.f32 %v2130, %v2131
      %v2133 = vsel %vm1999, %v1977, -inf
      %v2134 = vmax.f32 %v2132, %v2133
      %v2135 = vsel %vm1999, %v1978, -inf
      %v2136 = vmax.f32 %v2134, %v2135
      %v2137 = vrot.slane %v2136, 4
      %v2138 = vmax.f32 %v2136, %v2137
      %v2139 = vrot.slane %v2138, 2
      %v2140 = vmax.f32 %v2138, %v2139
      %v2141 = vrot.slane %v2140, 1
      %v2142 = vmax.f32 %v2140, %v2141
      %v2143 = vsel %vm1999, %v1979, -inf
      %v2144 = vsel %vm1999, %v1980, -inf
      %v2145 = vmax.f32 %v2143, %v2144
      %v2146 = vsel %vm1999, %v1981, -inf
      %v2147 = vmax.f32 %v2145, %v2146
      %v2148 = vsel %vm1999, %v1982, -inf
      %v2149 = vmax.f32 %v2147, %v2148
      %v2150 = vrot.slane %v2149, 4
      %v2151 = vmax.f32 %v2149, %v2150
      %v2152 = vrot.slane %v2151, 2
      %v2153 = vmax.f32 %v2151, %v2152
      %v2154 = vrot.slane %v2153, 1
      %v2155 = vmax.f32 %v2153, %v2154
      %v2156 = vsel %vm1999, %v1983, -inf
      %v2157 = vsel %vm1999, %v1984, -inf
      %v2158 = vmax.f32 %v2156, %v2157
      %v2159 = vsel %vm1999, %v1985, -inf
      %v2160 = vmax.f32 %v2158, %v2159
      %v2161 = vsel %vm1999, %v1986, -inf
      %v2162 = vmax.f32 %v2160, %v2161
      %v2163 = vrot.slane %v2162, 4
      %v2164 = vmax.f32 %v2162, %v2163
      %v2165 = vrot.slane %v2164, 2
      %v2166 = vmax.f32 %v2164, %v2165
      %v2167 = vrot.slane %v2166, 1
      %v2168 = vmax.f32 %v2166, %v2167
      %v2169 = vsel %vm1999, %v1987, -inf
      %v2170 = vsel %vm1999, %v1988, -inf
      %v2171 = vmax.f32 %v2169, %v2170
      %v2172 = vsel %vm1999, %v1989, -inf
      %v2173 = vmax.f32 %v2171, %v2172
      %v2174 = vsel %vm1999, %v1990, -inf
      %v2175 = vmax.f32 %v2173, %v2174
      %v2176 = vrot.slane %v2175, 4
      %v2177 = vmax.f32 %v2175, %v2176
      %v2178 = vrot.slane %v2177, 2
      %v2179 = vmax.f32 %v2177, %v2178
      %v2180 = vrot.slane %v2179, 1
      %v2181 = vmax.f32 %v2179, %v2180
      %v2182 = vsel %vm1999, %v1991, -inf
      %v2183 = vsel %vm1999, %v1992, -inf
      %v2184 = vmax.f32 %v2182, %v2183
      %v2185 = vsel %vm1999, %v1993, -inf
      %v2186 = vmax.f32 %v2184, %v2185
      %v2187 = vsel %vm1999, %v1994, -inf
      %v2188 = vmax.f32 %v2186, %v2187
      %v2189 = vrot.slane %v2188, 4
      %v2190 = vmax.f32 %v2188, %v2189
      %v2191 = vrot.slane %v2190, 2
      %v2192 = vmax.f32 %v2190, %v2191
      %v2193 = vrot.slane %v2192, 1
      %v2194 = vmax.f32 %v2192, %v2193
      %v2195 = vsel %vm1999, %v1995, -inf
      %v2196 = vsel %vm1999, %v1996, -inf
      %v2197 = vmax.f32 %v2195, %v2196
      %v2198 = vsel %vm1999, %v1997, -inf
      %v2199 = vmax.f32 %v2197, %v2198
      %v2200 = vsel %vm1999, %v1998, -inf
      %v2201 = vmax.f32 %v2199, %v2200
      %v2202 = vrot.slane %v2201, 4
      %v2203 = vmax.f32 %v2201, %v2202
      %v2204 = vrot.slane %v2203, 2
      %v2205 = vmax.f32 %v2203, %v2204
      %v2206 = vrot.slane %v2205, 1
      %v2207 = vmax.f32 %v2205, %v2206
      %v2208 = vmul.f32 %v1675, 0.03125
      %v2209 = vmul.f32 %v1688, 0.03125
      %v2210 = vmul.f32 %v1701, 0.03125
      %v2211 = vmul.f32 %v1714, 0.03125
      %v2212 = vmul.f32 %v1727, 0.03125
      %v2213 = vmul.f32 %v1740, 0.03125
      %v2214 = vmul.f32 %v1753, 0.03125
      %v2215 = vmul.f32 %v1766, 0.03125
      %v2216 = vmul.f32 %v1779, 0.03125
      %v2217 = vmul.f32 %v1792, 0.03125
      %v2218 = vmul.f32 %v1805, 0.03125
      %v2219 = vmul.f32 %v1818, 0.03125
      %v2220 = vmul.f32 %v1831, 0.03125
      %v2221 = vmul.f32 %v1844, 0.03125
      %v2222 = vmul.f32 %v1857, 0.03125
      %v2223 = vmul.f32 %v1870, 0.03125
      %2240 = vrot.lane.b32.xlu0 %v1675, 96
      %v2241 = vpop.permute.xlu0 %2240
      %2242 = vrot.lane.b32.xlu0 %v1688, 96
      %v2243 = vpop.permute.xlu0 %2242
      %2244 = vrot.lane.b32.xlu0 %v1701, 96
      %v2245 = vpop.permute.xlu0 %2244
      %2246 = vrot.lane.b32.xlu0 %v1714, 96
      %v2247 = vpop.permute.xlu0 %2246
      %2248 = vrot.lane.b32.xlu0 %v1727, 96
      %v2249 = vpop.permute.xlu0 %2248
      %2250 = vrot.lane.b32.xlu0 %v1740, 96
      %v2251 = vpop.permute.xlu0 %2250
      %2252 = vrot.lane.b32.xlu0 %v1753, 96
      %v2253 = vpop.permute.xlu0 %2252
      %2254 = vrot.lane.b32.xlu0 %v1766, 96
      %v2255 = vpop.permute.xlu0 %2254
      %2256 = vrot.lane.b32.xlu0 %v1779, 96
      %v2257 = vpop.permute.xlu0 %2256
      %2258 = vrot.lane.b32.xlu0 %v1792, 96
      %v2259 = vpop.permute.xlu0 %2258
      %2260 = vrot.lane.b32.xlu0 %v1805, 96
      %v2261 = vpop.permute.xlu0 %2260
      %2262 = vrot.lane.b32.xlu0 %v1818, 96
      %v2263 = vpop.permute.xlu0 %2262
      %2264 = vrot.lane.b32.xlu0 %v1831, 96
      %v2265 = vpop.permute.xlu0 %2264
      %2266 = vrot.lane.b32.xlu0 %v1844, 96
      %v2267 = vpop.permute.xlu0 %2266
      %2268 = vrot.lane.b32.xlu0 %v1857, 96
      %v2269 = vpop.permute.xlu0 %2268
      %2270 = vrot.lane.b32.xlu0 %v1870, 96
      %v2271 = vpop.permute.xlu0 %2270
      %v2288 = vadd.f32 %v2012, %v2241
      %v2289 = vadd.f32 %v2025, %v2243
      %v2290 = vadd.f32 %v2038, %v2245
      %v2291 = vadd.f32 %v2051, %v2247
      %v2292 = vadd.f32 %v2064, %v2249
      %v2293 = vadd.f32 %v2077, %v2251
      %v2294 = vadd.f32 %v2090, %v2253
      %v2295 = vadd.f32 %v2103, %v2255
      %v2296 = vadd.f32 %v2116, %v2257
      %v2297 = vadd.f32 %v2129, %v2259
      %v2298 = vadd.f32 %v2142, %v2261
      %v2299 = vadd.f32 %v2155, %v2263
      %v2300 = vadd.f32 %v2168, %v2265
      %v2301 = vadd.f32 %v2181, %v2267
      %v2302 = vadd.f32 %v2194, %v2269
      %v2303 = vadd.f32 %v2207, %v2271
      %v2304 = vmul.f32 %v2288, 0.5
      %v2305 = vmul.f32 %v2289, 0.5
      %v2306 = vmul.f32 %v2290, 0.5
      %v2307 = vmul.f32 %v2291, 0.5
      %v2308 = vmul.f32 %v2292, 0.5
      %v2309 = vmul.f32 %v2293, 0.5
      %v2310 = vmul.f32 %v2294, 0.5
      %v2311 = vmul.f32 %v2295, 0.5
      %v2312 = vmul.f32 %v2296, 0.5
      %v2313 = vmul.f32 %v2297, 0.5
      %v2314 = vmul.f32 %v2298, 0.5
      %v2315 = vmul.f32 %v2299, 0.5
      %v2316 = vmul.f32 %v2300, 0.5
      %v2317 = vmul.f32 %v2301, 0.5
      %v2318 = vmul.f32 %v2302, 0.5
      %v2319 = vmul.f32 %v2303, 0.5
      %v2320 = vadd.f32 %v2208, %v2304
      %v2321 = vadd.f32 %v2209, %v2305
      %v2322 = vadd.f32 %v2210, %v2306
      %v2323 = vadd.f32 %v2211, %v2307
      %v2324 = vadd.f32 %v2212, %v2308
      %v2325 = vadd.f32 %v2213, %v2309
      %v2326 = vadd.f32 %v2214, %v2310
      %v2327 = vadd.f32 %v2215, %v2311
      %v2328 = vadd.f32 %v2216, %v2312
      %v2329 = vadd.f32 %v2217, %v2313
      %v2330 = vadd.f32 %v2218, %v2314
      %v2331 = vadd.f32 %v2219, %v2315
      %v2332 = vadd.f32 %v2220, %v2316
      %v2333 = vadd.f32 %v2221, %v2317
      %v2334 = vadd.f32 %v2222, %v2318
      %v2335 = vadd.f32 %v2223, %v2319
      %v2352 = vrot.slane %v2321, 7
      %vm2353 = vcmask 1041409
      %v2354 = vsel %vm2353, %v2352, %v2320
      %v2355 = vrot.slane %v2322, 6
      %vm2356 = vcmask 1042434
      %v2357 = vsel %vm2356, %v2355, %v2354
      %v2358 = vrot.slane %v2323, 5
      %vm2359 = vcmask 1043459
      %v2360 = vsel %vm2359, %v2358, %v2357
      %v2361 = vrot.slane %v2324, 4
      %vm2362 = vcmask 1044484
      %v2363 = vsel %vm2362, %v2361, %v2360
      %v2364 = vrot.slane %v2325, 3
      %vm2365 = vcmask 1045509
      %v2366 = vsel %vm2365, %v2364, %v2363
      %v2367 = vrot.slane %v2326, 2
      %vm2368 = vcmask 1046534
      %v2369 = vsel %vm2368, %v2367, %v2366
      %v2370 = vrot.slane %v2327, 1
      %vm2371 = vcmask 1047559
      %v2372 = vsel %vm2371, %v2370, %v2369
      %v2373 = vrot.slane %v2329, 7
      %v2374 = vsel %vm2353, %v2373, %v2328
      %v2375 = vrot.slane %v2330, 6
      %v2376 = vsel %vm2356, %v2375, %v2374
      %v2377 = vrot.slane %v2331, 5
      %v2378 = vsel %vm2359, %v2377, %v2376
      %v2379 = vrot.slane %v2332, 4
      %v2380 = vsel %vm2362, %v2379, %v2378
      %v2381 = vrot.slane %v2333, 3
      %v2382 = vsel %vm2365, %v2381, %v2380
      %v2383 = vrot.slane %v2334, 2
      %v2384 = vsel %vm2368, %v2383, %v2382
      %v2385 = vrot.slane %v2335, 1
      %v2386 = vsel %vm2371, %v2385, %v2384
      %2387 = vrot.lane.b32.xlu0 %v2372, 64
      %v2388 = vpop.permute.xlu0 %2387
      %2389 = vrot.lane.b32.xlu0 %v2386, 64
      %v2390 = vpop.permute.xlu0 %2389
      %vm2393 = vcmask 261120
      %2394 = vst.msk [vmem:[%s175] sm:$0xff] %vm2393, %v2388
      %2395 = vst.msk [vmem:[%s175 + $0x8] sm:$0xff] %vm2393, %v2390
      %s2396 = smul.u32 2, %s14
      %p2397 = scmp.lt.s32.totalorder %s2396, 7
      %s2398 = scalar_select %p2397, %s2396, 7
      %s2399 = smul.addr %s2398, 8
      %s2400 = scalar_lea.vmem %s3, %s2399
      // Predicated region
      $region33: #{tpu_custom_call.1} parent=31 // pred_check
        %p2401 = pneg %p100
      $region34: #{tpu_custom_call.1} parent=31 // pred_check_branch
        %2403 = sbr.rel (%p2401) target = $region36
      $region35: #{tpu_custom_call.1} parent=31 // pred_region
        %s2404 = smul.u32 2, %s14
      $region36: #{tpu_custom_call.1} parent=31 // pred_fallthru
        _
    $region32: #{tpu_custom_call.1} parent=5 // pred_fallthru
      _
    %p2405 = scmp.le.s32.totalorder 2, %s9
    // Predicated region
    $region37: #{tpu_custom_call.1} parent=5 // pred_check
      %p2406 = pneg %p2405
    $region38: #{tpu_custom_call.1} parent=5 // pred_check_branch
      %2408 = sbr.rel (%p2406) target = $region40
    $region39: #{tpu_custom_call.1} parent=5 // pred_region
      %s2409 = ssub.s32 %s9, 2
      // Predicated region
      $region41: #{tpu_custom_call.1} parent=39 // pred_check
        %p2410 = pneg %p106
      $region42: #{tpu_custom_call.1} parent=39 // pred_check_branch
        %2412 = sbr.rel (%p2410) target = $region44
      $region43: #{tpu_custom_call.1} parent=39 // pred_region
        %s2413 = smul.u32 2, %s15
        %p2414 = scmp.lt.s32.totalorder %s2413, 7
        %s2415 = scalar_select %p2414, %s2413, 7
        %s2416 = smul.addr %s2415, 8
        %s2417 = scalar_lea.vmem %s3, %s2416
      $region44: #{tpu_custom_call.1} parent=39 // pred_fallthru
        _
    $region40: #{tpu_custom_call.1} parent=5 // pred_fallthru
      _
  $region6: #{tpu_custom_call.1} parent=0 // loop_footer
    %s13 = sadd.s32 1, %s9
  $region7: #{tpu_custom_call.1} parent=0 // loop_footer_branch
    %8 = sbr.rel target = $region3
  $region8: #{tpu_custom_call.1} parent=0 // loop_exit
    _

</llo_original>
